<compile_context>
chip_gen: v7x
topology: tpu7x:2x2x1
jax: 0.10.0
libtpu: 0.0.40
codegen_flags: <defaults>
</compile_context>

<pallas_src>
import functools

import jax
import jax.numpy as jnp
from jax.experimental import pallas as pl
from jax.experimental.pallas import tpu as pltpu


def char_cnn_highway_kernel(idst_ref, wfold_ref, bconv_ref, whw_ref, bhw_ref,
                            out_ref, *, K, tap_stride, L_out):
    ids_t = idst_ref[...]                       # (Tp, tn) int32, time-major, pre-padded
    tn = ids_t.shape[1]
    kv_pad, e_word = wfold_ref.shape

    # ---- 1-3) conv (with folded char table) as ONE deep one-hot matmul -------------
    iota = jax.lax.broadcasted_iota(jnp.int32, (1, 1, kv_pad), 2)
    oh = None
    for k in range(K):
        # shifted ids for tap k land in the disjoint block [k*tap_stride, (k+1)*tap_stride)
        win = ids_t[k:k + L_out, :][:, :, None] + (k * tap_stride)   # (L_out, tn, 1)
        m = win == iota                                              # (L_out, tn, kv_pad)
        oh = m if oh is None else (oh | m)                           # disjoint -> OR == sum
    # leading-dim merge is layout-free (tn is a multiple of 8)
    onehot = oh.astype(jnp.bfloat16).reshape(L_out * tn, kv_pad)

    acc = jnp.dot(onehot, wfold_ref[...],
                  preferred_element_type=jnp.float32)                # (L_out*tn, e_word) f32
    acc = acc.reshape(L_out, tn, e_word)                             # free split

    # ---- 3) max-over-time, then bias + ReLU (monotone -> identical result) ---------
    conv_out = jnp.maximum(jnp.max(acc, axis=0) + bconv_ref[...], 0.0)   # (tn, e_word)

    # ---- 4) Highway with fused [proj | gate] matmul (128-lane result) --------------
    hw = jnp.dot(conv_out.astype(jnp.bfloat16), whw_ref[...],
                 preferred_element_type=jnp.float32) + bhw_ref[...]
    proj = jnp.maximum(hw[:, :e_word], 0.0)
    gate = jax.nn.sigmoid(hw[:, e_word:])
    out = gate * proj + (1.0 - gate) * conv_out

    # ---- 5) dropout == identity (eval mode) -----------------------------------------
    out_ref[...] = out.astype(out_ref.dtype)


def _default_tile_n():
    """Per-generation tile default (v6e/v7x take bigger tiles; v5e stays at 256)."""
    try:
        kind = jax.devices()[0].device_kind.lower()
    except Exception:
        return 256
    if "v6" in kind or "v7" in kind:
        return 512
    return 256


def model_embeddings_forward(char_ids, emb_table, w_conv, b_conv,
                             w_proj, b_proj, w_gate, b_gate,
                             *, padding=1, tile_n=None):
    """char_ids: (sentence_len, batch, m_word) int32 -> (sentence_len, batch, e_word)."""
    L, B, m_word = char_ids.shape
    vocab, e_char = emb_table.shape
    K, _, e_word = w_conv.shape
    N = L * B
    Tp = m_word + 2 * padding
    L_out = Tp - K + 1

    if tile_n is None:
        tile_n = _default_tile_n()

    # ---- Fold char-embedding table into the conv taps (f32, wrapper side) ----------
    # Per-tap block of stride V1 = vocab + 1; row `vocab` of every block is zero so the
    # pad index reproduces Conv1d's zero time-padding exactly for any embedding table.
    V1 = vocab + 1
    kv = K * V1
    kv_pad = ((kv + 127) // 128) * 128
    w_fold = jnp.einsum('vc,kcf->kvf', emb_table.astype(jnp.float32),
                        w_conv.astype(jnp.float32))                  # (K, vocab, e_word)
    w_fold = jnp.pad(w_fold, ((0, 0), (0, 1), (0, 0)))                # zero row at v=vocab
    w_stack = jnp.pad(w_fold.reshape(kv, e_word), ((0, kv_pad - kv), (0, 0)))
    w_stack = w_stack.astype(jnp.bfloat16)                            # (kv_pad, e_word)

    w_hw = jnp.concatenate([w_proj, w_gate], axis=1).astype(jnp.bfloat16)   # (e_word, 2E)
    b_hw = jnp.concatenate([b_proj.reshape(1, e_word),
                            b_gate.reshape(1, e_word)], axis=1).astype(jnp.float32)
    b_conv_f32 = b_conv.reshape(1, e_word).astype(jnp.float32)

    # ---- Tile sizing + ragged-N handling --------------------------------------------
    pad_id = vocab                      # maps to the zero folded row in every tap block
    if N <= tile_n:
        tile_n = max(8, ((N + 7) // 8) * 8)     # single lane-dense-enough tile
        n_pad = tile_n
    else:
        tile_n = max(128, (tile_n // 128) * 128)  # lane-dense time-major id blocks
        n_pad = ((N + tile_n - 1) // tile_n) * tile_n

    ids = char_ids.reshape(N, m_word).astype(jnp.int32)
    # time-major + time padding + ragged-N fill, all with the zero-row pad index
    ids_t = jnp.pad(ids.T, ((padding, padding), (0, n_pad - N)),
                    constant_values=pad_id)                           # (Tp, n_pad)

    grid = (n_pad // tile_n,)
    kernel = functools.partial(char_cnn_highway_kernel,
                               K=K, tap_stride=V1, L_out=L_out)

    out = pl.pallas_call(
        kernel,
        out_shape=jax.ShapeDtypeStruct((n_pad, e_word), jnp.float32),
        grid_spec=pltpu.PrefetchScalarGridSpec(
            num_scalar_prefetch=0,
            grid=grid,
            in_specs=[
                pl.BlockSpec((Tp, tile_n),         lambda i: (0, i)),  # time-major char ids
                pl.BlockSpec((kv_pad, e_word),     lambda i: (0, 0)),  # folded conv weight
                pl.BlockSpec((1, e_word),          lambda i: (0, 0)),  # conv bias
                pl.BlockSpec((e_word, 2 * e_word), lambda i: (0, 0)),  # [proj|gate] weight
                pl.BlockSpec((1, 2 * e_word),      lambda i: (0, 0)),  # [proj|gate] bias
            ],
            out_specs=pl.BlockSpec((tile_n, e_word), lambda i: (i, 0)),
        ),
        compiler_params=pltpu.CompilerParams(
            dimension_semantics=("parallel",)),
    )(ids_t, w_stack, b_conv_f32, w_hw, b_hw)

    out = out[:N]
    # Dropout == identity (eval); reshape back to (sentence_len, batch, e_word).
    return out.reshape(L, B, e_word)


def reference_forward(char_ids, emb_table, w_conv, b_conv,
                      w_proj, b_proj, w_gate, b_gate, *, padding=1):
    """Pure-JAX f32 reference mirroring the PyTorch module."""
    L, B, m_word = char_ids.shape
    N = L * B
    K, _, e_word = w_conv.shape
    x = jnp.take(emb_table, char_ids.reshape(N, m_word), axis=0)
    xp = jnp.pad(x, ((0, 0), (padding, padding), (0, 0)))
    L_out = m_word + 2 * padding - K + 1
    acc = jnp.zeros((N, L_out, e_word), jnp.float32)
    for k in range(K):
        acc = acc + jnp.einsum('nlc,cf->nlf', xp[:, k:k + L_out, :], w_conv[k])
    acc = acc + b_conv[None, :, :]
    conv_out = jnp.max(jnp.maximum(acc, 0.0), axis=1)
    proj = jnp.maximum(conv_out @ w_proj + b_proj, 0.0)
    gate = jax.nn.sigmoid(conv_out @ w_gate + b_gate)
    out = gate * proj + (1.0 - gate) * conv_out
    return out.reshape(L, B, e_word)


if __name__ == "__main__":
    # Small shapes consistent with the module (module default e_char=30).
    sentence_len, batch, m_word = 8, 2, 16
    vocab_chars, char_pad_idx = 50, 0
    e_char, word_embed_size = 30, 64
    kernel_size, padding = 5, 1

    key = jax.random.PRNGKey(0)
    k_in, k_emb, k_wc, k_bc, k_wp, k_bp, k_wg, k_bg = jax.random.split(key, 8)

    # Input char indices (sentence_len, batch, max_word_length).
    char_ids = jax.random.randint(k_in, (sentence_len, batch, m_word),
                                  0, vocab_chars, dtype=jnp.int32)

    # Deterministic synthetic parameters.
    emb_table = 0.1 * jax.random.normal(k_emb, (vocab_chars, e_char), jnp.float32)
    emb_table = emb_table.at[char_pad_idx].set(0.0)      # nn.Embedding padding_idx row
    w_conv = 0.1 * jax.random.normal(k_wc, (kernel_size, e_char, word_embed_size), jnp.float32)
    b_conv = 0.1 * jax.random.normal(k_bc, (1, word_embed_size), jnp.float32)
    w_proj = 0.1 * jax.random.normal(k_wp, (word_embed_size, word_embed_size), jnp.float32)
    b_proj = 0.1 * jax.random.normal(k_bp, (1, word_embed_size), jnp.float32)
    w_gate = 0.1 * jax.random.normal(k_wg, (word_embed_size, word_embed_size), jnp.float32)
    b_gate = 0.1 * jax.random.normal(k_bg, (1, word_embed_size), jnp.float32)

    out = model_embeddings_forward(char_ids, emb_table, w_conv, b_conv,
                                   w_proj, b_proj, w_gate, b_gate,
                                   padding=padding)
    out = jax.block_until_ready(out)

    ref = reference_forward(char_ids, emb_table, w_conv, b_conv,
                            w_proj, b_proj, w_gate, b_gate, padding=padding)
    assert out.shape == (sentence_len, batch, word_embed_size)
    # bf16 folded weights / MXU operands (f32 accumulation) vs f32 reference.
    assert jnp.allclose(out, ref, atol=2e-2, rtol=2e-2)
    assert bool(jnp.all(jnp.isfinite(out)))
    print("KERNEL_OK")
</pallas_src>

<mosaic_0001>
module attributes {stable_mosaic.version = 11 : i64} {
  func.func @char_cnn_highway_kernel(%arg0: i32, %arg1: memref<18x16xi32, #tpu.memory_space<vmem>>, %arg2: memref<256x64xbf16, #tpu.memory_space<vmem>>, %arg3: memref<1x64xf32, #tpu.memory_space<vmem>>, %arg4: memref<64x128xbf16, #tpu.memory_space<vmem>>, %arg5: memref<1x128xf32, #tpu.memory_space<vmem>>, %arg6: memref<16x64xf32, #tpu.memory_space<vmem>>) attributes {dimension_semantics = [#tpu.dimension_semantics<parallel>], iteration_bounds = array<i64: 1>, scalar_prefetch = 0 : i64, scratch_operands = 0 : i64, tpu.core_type = #tpu.core_type<tc>, window_params = [{transform_indices = @transform_0, window_bounds = array<i64: 18, 16>}, {pipeline_mode = #tpu.pipeline_mode<synchronous>, transform_indices = @transform_1, window_bounds = array<i64: 256, 64>}, {pipeline_mode = #tpu.pipeline_mode<synchronous>, transform_indices = @transform_2, window_bounds = array<i64: 1, 64>}, {pipeline_mode = #tpu.pipeline_mode<synchronous>, transform_indices = @transform_3, window_bounds = array<i64: 64, 128>}, {pipeline_mode = #tpu.pipeline_mode<synchronous>, transform_indices = @transform_4, window_bounds = array<i64: 1, 128>}, {transform_indices = @transform_5, window_bounds = array<i64: 16, 64>}]} {
    %c0 = arith.constant 0 : index
    %c0_0 = arith.constant 0 : index
    %0 = vector.load %arg1[%c0, %c0_0] : memref<18x16xi32, #tpu.memory_space<vmem>>, vector<18x16xi32>
    %1 = tpu.iota {dimensions = array<i32: 2>} : vector<1x1x256xi32>
    %2 = vector.extract_strided_slice %0 {offsets = [0, 0], sizes = [14, 16], strides = [1, 1]} : vector<18x16xi32> to vector<14x16xi32>
    %3 = vector.shape_cast %2 : vector<14x16xi32> to vector<14x16x1xi32>
    %c0_i32 = arith.constant 0 : i32
    %4 = vector.broadcast %c0_i32 : i32 to vector<14x16x1xi32>
    %5 = arith.addi %3, %4 : vector<14x16x1xi32>
    %6 = vector.broadcast %5 : vector<14x16x1xi32> to vector<14x16x256xi32>
    %7 = vector.broadcast %1 : vector<1x1x256xi32> to vector<14x16x256xi32>
    %8 = arith.cmpi eq, %6, %7 : vector<14x16x256xi32>
    %9 = vector.extract_strided_slice %0 {offsets = [1, 0], sizes = [14, 16], strides = [1, 1]} : vector<18x16xi32> to vector<14x16xi32>
    %10 = vector.shape_cast %9 : vector<14x16xi32> to vector<14x16x1xi32>
    %c51_i32 = arith.constant 51 : i32
    %11 = vector.broadcast %c51_i32 : i32 to vector<14x16x1xi32>
    %12 = arith.addi %10, %11 : vector<14x16x1xi32>
    %13 = vector.broadcast %12 : vector<14x16x1xi32> to vector<14x16x256xi32>
    %14 = vector.broadcast %1 : vector<1x1x256xi32> to vector<14x16x256xi32>
    %15 = arith.cmpi eq, %13, %14 : vector<14x16x256xi32>
    %16 = arith.ori %8, %15 : vector<14x16x256xi1>
    %17 = vector.extract_strided_slice %0 {offsets = [2, 0], sizes = [14, 16], strides = [1, 1]} : vector<18x16xi32> to vector<14x16xi32>
    %18 = vector.shape_cast %17 : vector<14x16xi32> to vector<14x16x1xi32>
    %c102_i32 = arith.constant 102 : i32
    %19 = vector.broadcast %c102_i32 : i32 to vector<14x16x1xi32>
    %20 = arith.addi %18, %19 : vector<14x16x1xi32>
    %21 = vector.broadcast %20 : vector<14x16x1xi32> to vector<14x16x256xi32>
    %22 = vector.broadcast %1 : vector<1x1x256xi32> to vector<14x16x256xi32>
    %23 = arith.cmpi eq, %21, %22 : vector<14x16x256xi32>
    %24 = arith.ori %16, %23 : vector<14x16x256xi1>
    %25 = vector.extract_strided_slice %0 {offsets = [3, 0], sizes = [14, 16], strides = [1, 1]} : vector<18x16xi32> to vector<14x16xi32>
    %26 = vector.shape_cast %25 : vector<14x16xi32> to vector<14x16x1xi32>
    %c153_i32 = arith.constant 153 : i32
    %27 = vector.broadcast %c153_i32 : i32 to vector<14x16x1xi32>
    %28 = arith.addi %26, %27 : vector<14x16x1xi32>
    %29 = vector.broadcast %28 : vector<14x16x1xi32> to vector<14x16x256xi32>
    %30 = vector.broadcast %1 : vector<1x1x256xi32> to vector<14x16x256xi32>
    %31 = arith.cmpi eq, %29, %30 : vector<14x16x256xi32>
    %32 = arith.ori %24, %31 : vector<14x16x256xi1>
    %33 = vector.extract_strided_slice %0 {offsets = [4, 0], sizes = [14, 16], strides = [1, 1]} : vector<18x16xi32> to vector<14x16xi32>
    %34 = vector.shape_cast %33 : vector<14x16xi32> to vector<14x16x1xi32>
    %c204_i32 = arith.constant 204 : i32
    %35 = vector.broadcast %c204_i32 : i32 to vector<14x16x1xi32>
    %36 = arith.addi %34, %35 : vector<14x16x1xi32>
    %37 = vector.broadcast %36 : vector<14x16x1xi32> to vector<14x16x256xi32>
    %38 = vector.broadcast %1 : vector<1x1x256xi32> to vector<14x16x256xi32>
    %39 = arith.cmpi eq, %37, %38 : vector<14x16x256xi32>
    %40 = arith.ori %32, %39 : vector<14x16x256xi1>
    %41 = arith.extui %40 : vector<14x16x256xi1> to vector<14x16x256xi32>
    %42 = arith.sitofp %41 : vector<14x16x256xi32> to vector<14x16x256xf32>
    %43 = arith.truncf %42 : vector<14x16x256xf32> to vector<14x16x256xbf16>
    %44 = vector.shape_cast %43 : vector<14x16x256xbf16> to vector<224x256xbf16>
    %c0_1 = arith.constant 0 : index
    %c0_2 = arith.constant 0 : index
    %45 = vector.load %arg2[%c0_1, %c0_2] : memref<256x64xbf16, #tpu.memory_space<vmem>>, vector<256x64xbf16>
    %cst = arith.constant dense<0.000000e+00> : vector<224x64xf32>
    %46 = tpu.matmul %44, %45, %cst {dimension_numbers = #tpu.dot_dimension_numbers<[1], [0], [0], [1], [0, 0, 1, 1], [], []>} : vector<224x256xbf16>, vector<256x64xbf16>, vector<224x64xf32> -> vector<224x64xf32>
    %47 = vector.shape_cast %46 : vector<224x64xf32> to vector<14x16x64xf32>
    %cst_3 = arith.constant dense<0xFF800000> : vector<16x64xf32>
    %48 = vector.multi_reduction <maximumf>, %47, %cst_3 [0] : vector<14x16x64xf32> to vector<16x64xf32>
    %c0_4 = arith.constant 0 : index
    %c0_5 = arith.constant 0 : index
    %49 = vector.load %arg3[%c0_4, %c0_5] : memref<1x64xf32, #tpu.memory_space<vmem>>, vector<1x64xf32>
    %50 = vector.broadcast %49 : vector<1x64xf32> to vector<16x64xf32>
    %51 = arith.addf %48, %50 : vector<16x64xf32>
    %cst_6 = arith.constant 0.000000e+00 : f32
    %52 = vector.broadcast %cst_6 : f32 to vector<16x64xf32>
    %53 = arith.maximumf %51, %52 : vector<16x64xf32>
    %54 = arith.truncf %53 : vector<16x64xf32> to vector<16x64xbf16>
    %c0_7 = arith.constant 0 : index
    %c0_8 = arith.constant 0 : index
    %55 = vector.load %arg4[%c0_7, %c0_8] : memref<64x128xbf16, #tpu.memory_space<vmem>>, vector<64x128xbf16>
    %cst_9 = arith.constant dense<0.000000e+00> : vector<16x128xf32>
    %56 = tpu.matmul %54, %55, %cst_9 {dimension_numbers = #tpu.dot_dimension_numbers<[1], [0], [0], [1], [0, 0, 1, 1], [], []>} : vector<16x64xbf16>, vector<64x128xbf16>, vector<16x128xf32> -> vector<16x128xf32>
    %c0_10 = arith.constant 0 : index
    %c0_11 = arith.constant 0 : index
    %57 = vector.load %arg5[%c0_10, %c0_11] : memref<1x128xf32, #tpu.memory_space<vmem>>, vector<1x128xf32>
    %58 = vector.broadcast %57 : vector<1x128xf32> to vector<16x128xf32>
    %59 = arith.addf %56, %58 : vector<16x128xf32>
    %60 = vector.extract_strided_slice %59 {offsets = [0, 0], sizes = [16, 64], strides = [1, 1]} : vector<16x128xf32> to vector<16x64xf32>
    %cst_12 = arith.constant 0.000000e+00 : f32
    %61 = vector.broadcast %cst_12 : f32 to vector<16x64xf32>
    %62 = arith.maximumf %60, %61 : vector<16x64xf32>
    %63 = vector.extract_strided_slice %59 {offsets = [0, 64], sizes = [16, 64], strides = [1, 1]} : vector<16x128xf32> to vector<16x64xf32>
    %64 = arith.negf %63 : vector<16x64xf32>
    %65 = math.exp %64 : vector<16x64xf32>
    %cst_13 = arith.constant 1.000000e+00 : f32
    %66 = vector.broadcast %cst_13 : f32 to vector<16x64xf32>
    %67 = arith.addf %66, %65 : vector<16x64xf32>
    %68 = arith.divf %66, %67 : vector<16x64xf32>
    %69 = arith.mulf %68, %62 : vector<16x64xf32>
    %cst_14 = arith.constant 1.000000e+00 : f32
    %70 = vector.broadcast %cst_14 : f32 to vector<16x64xf32>
    %71 = arith.subf %70, %68 : vector<16x64xf32>
    %72 = arith.mulf %71, %53 : vector<16x64xf32>
    %73 = arith.addf %69, %72 : vector<16x64xf32>
    %c0_15 = arith.constant 0 : index
    %c0_16 = arith.constant 0 : index
    %74 = vector.load %arg6[%c0_15, %c0_16] : memref<16x64xf32, #tpu.memory_space<vmem>>, vector<16x64xf32>
    tpu.vector_store %arg6[%c0_15, %c0_16], %73 {strides = array<i32>} : memref<16x64xf32, #tpu.memory_space<vmem>>, vector<16x64xf32>,
    return
  }
  func.func @transform_0(%arg0: i32) -> (i32, i32) {
    %c0_i32 = arith.constant 0 : i32
    %c0_i32_0 = arith.constant 0 : i32
    return %c0_i32, %arg0 : i32, i32
  }
  func.func @transform_1(%arg0: i32) -> (i32, i32) {
    %c0_i32 = arith.constant 0 : i32
    %c0_i32_0 = arith.constant 0 : i32
    %c0_i32_1 = arith.constant 0 : i32
    return %c0_i32, %c0_i32_0 : i32, i32
  }
  func.func @transform_2(%arg0: i32) -> (i32, i32) {
    %c0_i32 = arith.constant 0 : i32
    %c0_i32_0 = arith.constant 0 : i32
    %c0_i32_1 = arith.constant 0 : i32
    return %c0_i32, %c0_i32_0 : i32, i32
  }
  func.func @transform_3(%arg0: i32) -> (i32, i32) {
    %c0_i32 = arith.constant 0 : i32
    %c0_i32_0 = arith.constant 0 : i32
    %c0_i32_1 = arith.constant 0 : i32
    return %c0_i32, %c0_i32_0 : i32, i32
  }
  func.func @transform_4(%arg0: i32) -> (i32, i32) {
    %c0_i32 = arith.constant 0 : i32
    %c0_i32_0 = arith.constant 0 : i32
    %c0_i32_1 = arith.constant 0 : i32
    return %c0_i32, %c0_i32_0 : i32, i32
  }
  func.func @transform_5(%arg0: i32) -> (i32, i32) {
    %c0_i32 = arith.constant 0 : i32
    %c0_i32_0 = arith.constant 0 : i32
    return %arg0, %c0_i32 : i32, i32
  }
}

</mosaic_0001>

<llo_original>
// kernel: tpu_custom_call.1
$region0: #{tpu_custom_call.1}
  #allocation0 [shape = 'u32[]', space=smem, size = 0x4, offset = 0x4, fixed_abs, tag = 'smem constant byte address 0x4 - core index']
  #allocation1 [shape = 'u32[144,128]{1,0:T(1,128)}', space=vmem, size = 0x12000, scoped, tag = 'internal scratch']
  %s0 = inlined_call_operand.vmem [shape: s32[18,16], index: 0, kind: input, shape index: {}]
  %s1 = inlined_call_operand.vmem [shape: bf16[256,64], index: 1, kind: input, shape index: {}]
  %s2 = inlined_call_operand.vmem [shape: f32[1,64], index: 2, kind: input, shape index: {}]
  %s3 = inlined_call_operand.vmem [shape: bf16[64,128], index: 3, kind: input, shape index: {}]
  %s4 = inlined_call_operand.vmem [shape: f32[1,128], index: 4, kind: input, shape index: {}]
  %s5 = inlined_call_operand.hbm [shape: f32[16,64], index: 5, kind: output, shape index: {}]
  %s6 = sld [smem:[#allocation0]]
  $region30: #{tpu_custom_call.1} parent=0
    _
  %s8 = ssub.s32 1, %s6
  %s9 = scalar_select 0, %s8, %s6
  $region1: #{tpu_custom_call.1} parent=0
    #allocation2 [shape = 'u8[8192]{0}', space=vmem, size = 0x2000, scoped, tag = 'output window, operand 0, single buffered']
    #allocation3 [shape = 's32[1]{0}', space=sflag, size = 0x4, scoped, tag = 'scoped memory for tpu_custom_call.1']
    %10 = vsyncpa [#allocation3], 0
    // Predicated region
    $region2: #{tpu_custom_call.1} parent=1 // pred_check
      _
    $region3: #{tpu_custom_call.1} parent=1 // pred_check_branch
      %12 = sbr.rel (0) target = $region5
    $region4: #{tpu_custom_call.1} parent=1 // pred_region
      _
    $region5: #{tpu_custom_call.1} parent=1 // pred_fallthru
      _
    // Predicated region
    $region6: #{tpu_custom_call.1} parent=1 // pred_check
      _
    $region7: #{tpu_custom_call.1} parent=1 // pred_check_branch
      %14 = sbr.rel (0) target = $region9
    $region8: #{tpu_custom_call.1} parent=1 // pred_region
      _
    $region9: #{tpu_custom_call.1} parent=1 // pred_fallthru
      _
    // Predicated region
    $region10: #{tpu_custom_call.1} parent=1 // pred_check
      _
    $region11: #{tpu_custom_call.1} parent=1 // pred_check_branch
      %16 = sbr.rel (0) target = $region13
    $region12: #{tpu_custom_call.1} parent=1 // pred_region
      _
    $region13: #{tpu_custom_call.1} parent=1 // pred_fallthru
      _
    // Predicated region
    $region14: #{tpu_custom_call.1} parent=1 // pred_check
      _
    $region15: #{tpu_custom_call.1} parent=1 // pred_check_branch
      %18 = sbr.rel (0) target = $region17
    $region16: #{tpu_custom_call.1} parent=1 // pred_region
      _
    $region17: #{tpu_custom_call.1} parent=1 // pred_fallthru
      _
    // Predicated region
    $region18: #{tpu_custom_call.1} parent=1 // pred_check
      _
    $region19: #{tpu_custom_call.1} parent=1 // pred_check_branch
      %20 = sbr.rel (0) target = $region21
    $region20: #{tpu_custom_call.1} parent=1 // pred_region
      _
    $region21: #{tpu_custom_call.1} parent=1 // pred_fallthru
      _
    %v22 = vld [vmem:[%s0] sm:$0xff]
    %v23 = vld [vmem:[%s0 + $0x8] sm:$0xff]
    %v24 = vld [vmem:[%s0 + $0x10] sm:$0x3]
    %v25 = vlaneseq
    %v26 = vand.u32 %v25, 127
    %v27 = vadd.s32 %v26, 128
    %v28 = vlaneseq
    %v29 = vshrl.u32 %v28, 7
    %v30 = vsub.s32 0, %v29
    %v31 = vrot.slane %v22, %v30
    %33 = vbcast.lane.b32.xlu0 %v31, 256
    %v34 = vpop.permute.xlu0 %33
    %s36 = sor.u32 256, 8
    %37 = vbcast.lane.b32.xlu0 %v31, %s36
    %v38 = vpop.permute.xlu0 %37
    %v39 = vlaneseq
    %v40 = vshrl.u32 %v39, 7
    %v41 = vsub.s32 1, %v40
    %v42 = vrot.slane %v22, %v41
    %44 = vbcast.lane.b32.xlu0 %v42, 256
    %v45 = vpop.permute.xlu0 %44
    %s47 = sor.u32 256, 8
    %48 = vbcast.lane.b32.xlu0 %v42, %s47
    %v49 = vpop.permute.xlu0 %48
    %v50 = vlaneseq
    %v51 = vshrl.u32 %v50, 7
    %v52 = vsub.s32 2, %v51
    %v53 = vrot.slane %v22, %v52
    %55 = vbcast.lane.b32.xlu0 %v53, 256
    %v56 = vpop.permute.xlu0 %55
    %s58 = sor.u32 256, 8
    %59 = vbcast.lane.b32.xlu0 %v53, %s58
    %v60 = vpop.permute.xlu0 %59
    %v61 = vlaneseq
    %v62 = vshrl.u32 %v61, 7
    %v63 = vsub.s32 3, %v62
    %v64 = vrot.slane %v22, %v63
    %66 = vbcast.lane.b32.xlu0 %v64, 256
    %v67 = vpop.permute.xlu0 %66
    %s69 = sor.u32 256, 8
    %70 = vbcast.lane.b32.xlu0 %v64, %s69
    %v71 = vpop.permute.xlu0 %70
    %v72 = vlaneseq
    %v73 = vshrl.u32 %v72, 7
    %v74 = vsub.s32 4, %v73
    %v75 = vrot.slane %v22, %v74
    %77 = vbcast.lane.b32.xlu0 %v75, 256
    %v78 = vpop.permute.xlu0 %77
    %s80 = sor.u32 256, 8
    %81 = vbcast.lane.b32.xlu0 %v75, %s80
    %v82 = vpop.permute.xlu0 %81
    %v83 = vlaneseq
    %v84 = vshrl.u32 %v83, 7
    %v85 = vsub.s32 5, %v84
    %v86 = vrot.slane %v22, %v85
    %88 = vbcast.lane.b32.xlu0 %v86, 256
    %v89 = vpop.permute.xlu0 %88
    %s91 = sor.u32 256, 8
    %92 = vbcast.lane.b32.xlu0 %v86, %s91
    %v93 = vpop.permute.xlu0 %92
    %v94 = vlaneseq
    %v95 = vshrl.u32 %v94, 7
    %v96 = vsub.s32 6, %v95
    %v97 = vrot.slane %v22, %v96
    %99 = vbcast.lane.b32.xlu0 %v97, 256
    %v100 = vpop.permute.xlu0 %99
    %s102 = sor.u32 256, 8
    %103 = vbcast.lane.b32.xlu0 %v97, %s102
    %v104 = vpop.permute.xlu0 %103
    %v105 = vlaneseq
    %v106 = vshrl.u32 %v105, 7
    %v107 = vsub.s32 7, %v106
    %v108 = vrot.slane %v22, %v107
    %110 = vbcast.lane.b32.xlu0 %v108, 256
    %v111 = vpop.permute.xlu0 %110
    %s113 = sor.u32 256, 8
    %114 = vbcast.lane.b32.xlu0 %v108, %s113
    %v115 = vpop.permute.xlu0 %114
    %v116 = vlaneseq
    %v117 = vshrl.u32 %v116, 7
    %v118 = vsub.s32 0, %v117
    %v119 = vrot.slane %v23, %v118
    %121 = vbcast.lane.b32.xlu0 %v119, 256
    %v122 = vpop.permute.xlu0 %121
    %s124 = sor.u32 256, 8
    %125 = vbcast.lane.b32.xlu0 %v119, %s124
    %v126 = vpop.permute.xlu0 %125
    %v127 = vlaneseq
    %v128 = vshrl.u32 %v127, 7
    %v129 = vsub.s32 1, %v128
    %v130 = vrot.slane %v23, %v129
    %132 = vbcast.lane.b32.xlu0 %v130, 256
    %v133 = vpop.permute.xlu0 %132
    %s135 = sor.u32 256, 8
    %136 = vbcast.lane.b32.xlu0 %v130, %s135
    %v137 = vpop.permute.xlu0 %136
    %v138 = vlaneseq
    %v139 = vshrl.u32 %v138, 7
    %v140 = vsub.s32 2, %v139
    %v141 = vrot.slane %v23, %v140
    %143 = vbcast.lane.b32.xlu0 %v141, 256
    %v144 = vpop.permute.xlu0 %143
    %s146 = sor.u32 256, 8
    %147 = vbcast.lane.b32.xlu0 %v141, %s146
    %v148 = vpop.permute.xlu0 %147
    %v149 = vlaneseq
    %v150 = vshrl.u32 %v149, 7
    %v151 = vsub.s32 3, %v150
    %v152 = vrot.slane %v23, %v151
    %154 = vbcast.lane.b32.xlu0 %v152, 256
    %v155 = vpop.permute.xlu0 %154
    %s157 = sor.u32 256, 8
    %158 = vbcast.lane.b32.xlu0 %v152, %s157
    %v159 = vpop.permute.xlu0 %158
    %v160 = vlaneseq
    %v161 = vshrl.u32 %v160, 7
    %v162 = vsub.s32 4, %v161
    %v163 = vrot.slane %v23, %v162
    %165 = vbcast.lane.b32.xlu0 %v163, 256
    %v166 = vpop.permute.xlu0 %165
    %s168 = sor.u32 256, 8
    %169 = vbcast.lane.b32.xlu0 %v163, %s168
    %v170 = vpop.permute.xlu0 %169
    %v171 = vlaneseq
    %v172 = vshrl.u32 %v171, 7
    %v173 = vsub.s32 5, %v172
    %v174 = vrot.slane %v23, %v173
    %176 = vbcast.lane.b32.xlu0 %v174, 256
    %v177 = vpop.permute.xlu0 %176
    %s179 = sor.u32 256, 8
    %180 = vbcast.lane.b32.xlu0 %v174, %s179
    %v181 = vpop.permute.xlu0 %180
    %vm182 = vcmp.eq.s32.totalorder %v34, %v26
    %vm183 = vcmp.eq.s32.totalorder %v34, %v27
    %vm184 = vcmp.eq.s32.totalorder %v38, %v26
    %vm185 = vcmp.eq.s32.totalorder %v38, %v27
    %vm186 = vcmp.eq.s32.totalorder %v45, %v26
    %vm187 = vcmp.eq.s32.totalorder %v45, %v27
    %vm188 = vcmp.eq.s32.totalorder %v49, %v26
    %vm189 = vcmp.eq.s32.totalorder %v49, %v27
    %vm190 = vcmp.eq.s32.totalorder %v56, %v26
    %vm191 = vcmp.eq.s32.totalorder %v56, %v27
    %vm192 = vcmp.eq.s32.totalorder %v60, %v26
    %vm193 = vcmp.eq.s32.totalorder %v60, %v27
    %vm194 = vcmp.eq.s32.totalorder %v67, %v26
    %vm195 = vcmp.eq.s32.totalorder %v67, %v27
    %vm196 = vcmp.eq.s32.totalorder %v71, %v26
    %vm197 = vcmp.eq.s32.totalorder %v71, %v27
    %vm198 = vcmp.eq.s32.totalorder %v78, %v26
    %vm199 = vcmp.eq.s32.totalorder %v78, %v27
    %vm200 = vcmp.eq.s32.totalorder %v82, %v26
    %vm201 = vcmp.eq.s32.totalorder %v82, %v27
    %vm202 = vcmp.eq.s32.totalorder %v89, %v26
    %vm203 = vcmp.eq.s32.totalorder %v89, %v27
    %vm204 = vcmp.eq.s32.totalorder %v93, %v26
    %vm205 = vcmp.eq.s32.totalorder %v93, %v27
    %vm206 = vcmp.eq.s32.totalorder %v100, %v26
    %vm207 = vcmp.eq.s32.totalorder %v100, %v27
    %vm208 = vcmp.eq.s32.totalorder %v104, %v26
    %vm209 = vcmp.eq.s32.totalorder %v104, %v27
    %vm210 = vcmp.eq.s32.totalorder %v111, %v26
    %vm211 = vcmp.eq.s32.totalorder %v111, %v27
    %vm212 = vcmp.eq.s32.totalorder %v115, %v26
    %vm213 = vcmp.eq.s32.totalorder %v115, %v27
    %vm214 = vcmp.eq.s32.totalorder %v122, %v26
    %vm215 = vcmp.eq.s32.totalorder %v122, %v27
    %vm216 = vcmp.eq.s32.totalorder %v126, %v26
    %vm217 = vcmp.eq.s32.totalorder %v126, %v27
    %vm218 = vcmp.eq.s32.totalorder %v133, %v26
    %vm219 = vcmp.eq.s32.totalorder %v133, %v27
    %vm220 = vcmp.eq.s32.totalorder %v137, %v26
    %vm221 = vcmp.eq.s32.totalorder %v137, %v27
    %vm222 = vcmp.eq.s32.totalorder %v144, %v26
    %vm223 = vcmp.eq.s32.totalorder %v144, %v27
    %vm224 = vcmp.eq.s32.totalorder %v148, %v26
    %vm225 = vcmp.eq.s32.totalorder %v148, %v27
    %vm226 = vcmp.eq.s32.totalorder %v155, %v26
    %vm227 = vcmp.eq.s32.totalorder %v155, %v27
    %vm228 = vcmp.eq.s32.totalorder %v159, %v26
    %vm229 = vcmp.eq.s32.totalorder %v159, %v27
    %vm230 = vcmp.eq.s32.totalorder %v166, %v26
    %vm231 = vcmp.eq.s32.totalorder %v166, %v27
    %vm232 = vcmp.eq.s32.totalorder %v170, %v26
    %vm233 = vcmp.eq.s32.totalorder %v170, %v27
    %vm234 = vcmp.eq.s32.totalorder %v177, %v26
    %vm235 = vcmp.eq.s32.totalorder %v177, %v27
    %vm236 = vcmp.eq.s32.totalorder %v181, %v26
    %vm237 = vcmp.eq.s32.totalorder %v181, %v27
    %v238 = vlaneseq
    %v239 = vshrl.u32 %v238, 7
    %v240 = vsub.s32 6, %v239
    %v241 = vrot.slane %v23, %v240
    %243 = vbcast.lane.b32.xlu0 %v241, 256
    %v244 = vpop.permute.xlu0 %243
    %s246 = sor.u32 256, 8
    %247 = vbcast.lane.b32.xlu0 %v241, %s246
    %v248 = vpop.permute.xlu0 %247
    %v249 = vadd.s32 %v45, 51
    %v250 = vadd.s32 %v49, 51
    %v251 = vadd.s32 %v56, 51
    %v252 = vadd.s32 %v60, 51
    %v253 = vadd.s32 %v67, 51
    %v254 = vadd.s32 %v71, 51
    %v255 = vadd.s32 %v78, 51
    %v256 = vadd.s32 %v82, 51
    %v257 = vadd.s32 %v89, 51
    %v258 = vadd.s32 %v93, 51
    %v259 = vadd.s32 %v100, 51
    %v260 = vadd.s32 %v104, 51
    %v261 = vadd.s32 %v111, 51
    %v262 = vadd.s32 %v115, 51
    %v263 = vadd.s32 %v122, 51
    %v264 = vadd.s32 %v126, 51
    %v265 = vadd.s32 %v133, 51
    %v266 = vadd.s32 %v137, 51
    %v267 = vadd.s32 %v144, 51
    %v268 = vadd.s32 %v148, 51
    %v269 = vadd.s32 %v155, 51
    %v270 = vadd.s32 %v159, 51
    %v271 = vadd.s32 %v166, 51
    %v272 = vadd.s32 %v170, 51
    %v273 = vadd.s32 %v177, 51
    %v274 = vadd.s32 %v181, 51
    %v275 = vadd.s32 %v244, 51
    %v276 = vadd.s32 %v248, 51
    %vm277 = vcmp.eq.s32.totalorder %v249, %v26
    %vm278 = vcmp.eq.s32.totalorder %v249, %v27
    %vm279 = vcmp.eq.s32.totalorder %v250, %v26
    %vm280 = vcmp.eq.s32.totalorder %v250, %v27
    %vm281 = vcmp.eq.s32.totalorder %v251, %v26
    %vm282 = vcmp.eq.s32.totalorder %v251, %v27
    %vm283 = vcmp.eq.s32.totalorder %v252, %v26
    %vm284 = vcmp.eq.s32.totalorder %v252, %v27
    %vm285 = vcmp.eq.s32.totalorder %v253, %v26
    %vm286 = vcmp.eq.s32.totalorder %v253, %v27
    %vm287 = vcmp.eq.s32.totalorder %v254, %v26
    %vm288 = vcmp.eq.s32.totalorder %v254, %v27
    %vm289 = vcmp.eq.s32.totalorder %v255, %v26
    %vm290 = vcmp.eq.s32.totalorder %v255, %v27
    %vm291 = vcmp.eq.s32.totalorder %v256, %v26
    %vm292 = vcmp.eq.s32.totalorder %v256, %v27
    %vm293 = vcmp.eq.s32.totalorder %v257, %v26
    %vm294 = vcmp.eq.s32.totalorder %v257, %v27
    %vm295 = vcmp.eq.s32.totalorder %v258, %v26
    %vm296 = vcmp.eq.s32.totalorder %v258, %v27
    %vm297 = vcmp.eq.s32.totalorder %v259, %v26
    %vm298 = vcmp.eq.s32.totalorder %v259, %v27
    %vm299 = vcmp.eq.s32.totalorder %v260, %v26
    %vm300 = vcmp.eq.s32.totalorder %v260, %v27
    %vm301 = vcmp.eq.s32.totalorder %v261, %v26
    %vm302 = vcmp.eq.s32.totalorder %v261, %v27
    %vm303 = vcmp.eq.s32.totalorder %v262, %v26
    %vm304 = vcmp.eq.s32.totalorder %v262, %v27
    %vm305 = vcmp.eq.s32.totalorder %v263, %v26
    %vm306 = vcmp.eq.s32.totalorder %v263, %v27
    %vm307 = vcmp.eq.s32.totalorder %v264, %v26
    %vm308 = vcmp.eq.s32.totalorder %v264, %v27
    %vm309 = vcmp.eq.s32.totalorder %v265, %v26
    %vm310 = vcmp.eq.s32.totalorder %v265, %v27
    %vm311 = vcmp.eq.s32.totalorder %v266, %v26
    %vm312 = vcmp.eq.s32.totalorder %v266, %v27
    %vm313 = vcmp.eq.s32.totalorder %v267, %v26
    %vm314 = vcmp.eq.s32.totalorder %v267, %v27
    %vm315 = vcmp.eq.s32.totalorder %v268, %v26
    %vm316 = vcmp.eq.s32.totalorder %v268, %v27
    %vm317 = vcmp.eq.s32.totalorder %v269, %v26
    %vm318 = vcmp.eq.s32.totalorder %v269, %v27
    %vm319 = vcmp.eq.s32.totalorder %v270, %v26
    %vm320 = vcmp.eq.s32.totalorder %v270, %v27
    %vm321 = vcmp.eq.s32.totalorder %v271, %v26
    %vm322 = vcmp.eq.s32.totalorder %v271, %v27
    %vm323 = vcmp.eq.s32.totalorder %v272, %v26
    %vm324 = vcmp.eq.s32.totalorder %v272, %v27
    %vm325 = vcmp.eq.s32.totalorder %v273, %v26
    %vm326 = vcmp.eq.s32.totalorder %v273, %v27
    %vm327 = vcmp.eq.s32.totalorder %v274, %v26
    %vm328 = vcmp.eq.s32.totalorder %v274, %v27
    %vm329 = vcmp.eq.s32.totalorder %v275, %v26
    %vm330 = vcmp.eq.s32.totalorder %v275, %v27
    %vm331 = vcmp.eq.s32.totalorder %v276, %v26
    %vm332 = vcmp.eq.s32.totalorder %v276, %v27
    %vm333 = vmor %vm182, %vm277
    %vm334 = vmor %vm183, %vm278
    %vm335 = vmor %vm184, %vm279
    %vm336 = vmor %vm185, %vm280
    %vm337 = vmor %vm186, %vm281
    %vm338 = vmor %vm187, %vm282
    %vm339 = vmor %vm188, %vm283
    %vm340 = vmor %vm189, %vm284
    %vm341 = vmor %vm190, %vm285
    %vm342 = vmor %vm191, %vm286
    %vm343 = vmor %vm192, %vm287
    %vm344 = vmor %vm193, %vm288
    %vm345 = vmor %vm194, %vm289
    %vm346 = vmor %vm195, %vm290
    %vm347 = vmor %vm196, %vm291
    %vm348 = vmor %vm197, %vm292
    %vm349 = vmor %vm198, %vm293
    %vm350 = vmor %vm199, %vm294
    %vm351 = vmor %vm200, %vm295
    %vm352 = vmor %vm201, %vm296
    %vm353 = vmor %vm202, %vm297
    %vm354 = vmor %vm203, %vm298
    %vm355 = vmor %vm204, %vm299
    %vm356 = vmor %vm205, %vm300
    %vm357 = vmor %vm206, %vm301
    %vm358 = vmor %vm207, %vm302
    %vm359 = vmor %vm208, %vm303
    %vm360 = vmor %vm209, %vm304
    %vm361 = vmor %vm210, %vm305
    %vm362 = vmor %vm211, %vm306
    %vm363 = vmor %vm212, %vm307
    %vm364 = vmor %vm213, %vm308
    %vm365 = vmor %vm214, %vm309
    %vm366 = vmor %vm215, %vm310
    %vm367 = vmor %vm216, %vm311
    %vm368 = vmor %vm217, %vm312
    %vm369 = vmor %vm218, %vm313
    %vm370 = vmor %vm219, %vm314
    %vm371 = vmor %vm220, %vm315
    %vm372 = vmor %vm221, %vm316
    %vm373 = vmor %vm222, %vm317
    %vm374 = vmor %vm223, %vm318
    %vm375 = vmor %vm224, %vm319
    %vm376 = vmor %vm225, %vm320
    %vm377 = vmor %vm226, %vm321
    %vm378 = vmor %vm227, %vm322
    %vm379 = vmor %vm228, %vm323
    %vm380 = vmor %vm229, %vm324
    %vm381 = vmor %vm230, %vm325
    %vm382 = vmor %vm231, %vm326
    %vm383 = vmor %vm232, %vm327
    %vm384 = vmor %vm233, %vm328
    %vm385 = vmor %vm234, %vm329
    %vm386 = vmor %vm235, %vm330
    %vm387 = vmor %vm236, %vm331
    %vm388 = vmor %vm237, %vm332
    %v389 = vlaneseq
    %v390 = vshrl.u32 %v389, 7
    %v391 = vsub.s32 7, %v390
    %v392 = vrot.slane %v23, %v391
    %394 = vbcast.lane.b32.xlu0 %v392, 256
    %v395 = vpop.permute.xlu0 %394
    %s397 = sor.u32 256, 8
    %398 = vbcast.lane.b32.xlu0 %v392, %s397
    %v399 = vpop.permute.xlu0 %398
    %v400 = vadd.s32 %v56, 102
    %v401 = vadd.s32 %v60, 102
    %v402 = vadd.s32 %v67, 102
    %v403 = vadd.s32 %v71, 102
    %v404 = vadd.s32 %v78, 102
    %v405 = vadd.s32 %v82, 102
    %v406 = vadd.s32 %v89, 102
    %v407 = vadd.s32 %v93, 102
    %v408 = vadd.s32 %v100, 102
    %v409 = vadd.s32 %v104, 102
    %v410 = vadd.s32 %v111, 102
    %v411 = vadd.s32 %v115, 102
    %v412 = vadd.s32 %v122, 102
    %v413 = vadd.s32 %v126, 102
    %v414 = vadd.s32 %v133, 102
    %v415 = vadd.s32 %v137, 102
    %v416 = vadd.s32 %v144, 102
    %v417 = vadd.s32 %v148, 102
    %v418 = vadd.s32 %v155, 102
    %v419 = vadd.s32 %v159, 102
    %v420 = vadd.s32 %v166, 102
    %v421 = vadd.s32 %v170, 102
    %v422 = vadd.s32 %v177, 102
    %v423 = vadd.s32 %v181, 102
    %v424 = vadd.s32 %v244, 102
    %v425 = vadd.s32 %v248, 102
    %v426 = vadd.s32 %v395, 102
    %v427 = vadd.s32 %v399, 102
    %vm428 = vcmp.eq.s32.totalorder %v400, %v26
    %vm429 = vcmp.eq.s32.totalorder %v400, %v27
    %vm430 = vcmp.eq.s32.totalorder %v401, %v26
    %vm431 = vcmp.eq.s32.totalorder %v401, %v27
    %vm432 = vcmp.eq.s32.totalorder %v402, %v26
    %vm433 = vcmp.eq.s32.totalorder %v402, %v27
    %vm434 = vcmp.eq.s32.totalorder %v403, %v26
    %vm435 = vcmp.eq.s32.totalorder %v403, %v27
    %vm436 = vcmp.eq.s32.totalorder %v404, %v26
    %vm437 = vcmp.eq.s32.totalorder %v404, %v27
    %vm438 = vcmp.eq.s32.totalorder %v405, %v26
    %vm439 = vcmp.eq.s32.totalorder %v405, %v27
    %vm440 = vcmp.eq.s32.totalorder %v406, %v26
    %vm441 = vcmp.eq.s32.totalorder %v406, %v27
    %vm442 = vcmp.eq.s32.totalorder %v407, %v26
    %vm443 = vcmp.eq.s32.totalorder %v407, %v27
    %vm444 = vcmp.eq.s32.totalorder %v408, %v26
    %vm445 = vcmp.eq.s32.totalorder %v408, %v27
    %vm446 = vcmp.eq.s32.totalorder %v409, %v26
    %vm447 = vcmp.eq.s32.totalorder %v409, %v27
    %vm448 = vcmp.eq.s32.totalorder %v410, %v26
    %vm449 = vcmp.eq.s32.totalorder %v410, %v27
    %vm450 = vcmp.eq.s32.totalorder %v411, %v26
    %vm451 = vcmp.eq.s32.totalorder %v411, %v27
    %vm452 = vcmp.eq.s32.totalorder %v412, %v26
    %vm453 = vcmp.eq.s32.totalorder %v412, %v27
    %vm454 = vcmp.eq.s32.totalorder %v413, %v26
    %vm455 = vcmp.eq.s32.totalorder %v413, %v27
    %vm456 = vcmp.eq.s32.totalorder %v414, %v26
    %vm457 = vcmp.eq.s32.totalorder %v414, %v27
    %vm458 = vcmp.eq.s32.totalorder %v415, %v26
    %vm459 = vcmp.eq.s32.totalorder %v415, %v27
    %vm460 = vcmp.eq.s32.totalorder %v416, %v26
    %vm461 = vcmp.eq.s32.totalorder %v416, %v27
    %vm462 = vcmp.eq.s32.totalorder %v417, %v26
    %vm463 = vcmp.eq.s32.totalorder %v417, %v27
    %vm464 = vcmp.eq.s32.totalorder %v418, %v26
    %vm465 = vcmp.eq.s32.totalorder %v418, %v27
    %vm466 = vcmp.eq.s32.totalorder %v419, %v26
    %vm467 = vcmp.eq.s32.totalorder %v419, %v27
    %vm468 = vcmp.eq.s32.totalorder %v420, %v26
    %vm469 = vcmp.eq.s32.totalorder %v420, %v27
    %vm470 = vcmp.eq.s32.totalorder %v421, %v26
    %vm471 = vcmp.eq.s32.totalorder %v421, %v27
    %vm472 = vcmp.eq.s32.totalorder %v422, %v26
    %vm473 = vcmp.eq.s32.totalorder %v422, %v27
    %vm474 = vcmp.eq.s32.totalorder %v423, %v26
    %vm475 = vcmp.eq.s32.totalorder %v423, %v27
    %vm476 = vcmp.eq.s32.totalorder %v424, %v26
    %vm477 = vcmp.eq.s32.totalorder %v424, %v27
    %vm478 = vcmp.eq.s32.totalorder %v425, %v26
    %vm479 = vcmp.eq.s32.totalorder %v425, %v27
    %vm480 = vcmp.eq.s32.totalorder %v426, %v26
    %vm481 = vcmp.eq.s32.totalorder %v426, %v27
    %vm482 = vcmp.eq.s32.totalorder %v427, %v26
    %vm483 = vcmp.eq.s32.totalorder %v427, %v27
    %vm484 = vmor %vm333, %vm428
    %vm485 = vmor %vm334, %vm429
    %vm486 = vmor %vm335, %vm430
    %vm487 = vmor %vm336, %vm431
    %vm488 = vmor %vm337, %vm432
    %vm489 = vmor %vm338, %vm433
    %vm490 = vmor %vm339, %vm434
    %vm491 = vmor %vm340, %vm435
    %vm492 = vmor %vm341, %vm436
    %vm493 = vmor %vm342, %vm437
    %vm494 = vmor %vm343, %vm438
    %vm495 = vmor %vm344, %vm439
    %vm496 = vmor %vm345, %vm440
    %vm497 = vmor %vm346, %vm441
    %vm498 = vmor %vm347, %vm442
    %vm499 = vmor %vm348, %vm443
    %vm500 = vmor %vm349, %vm444
    %vm501 = vmor %vm350, %vm445
    %vm502 = vmor %vm351, %vm446
    %vm503 = vmor %vm352, %vm447
    %vm504 = vmor %vm353, %vm448
    %vm505 = vmor %vm354, %vm449
    %vm506 = vmor %vm355, %vm450
    %vm507 = vmor %vm356, %vm451
    %vm508 = vmor %vm357, %vm452
    %vm509 = vmor %vm358, %vm453
    %vm510 = vmor %vm359, %vm454
    %vm511 = vmor %vm360, %vm455
    %vm512 = vmor %vm361, %vm456
    %vm513 = vmor %vm362, %vm457
    %vm514 = vmor %vm363, %vm458
    %vm515 = vmor %vm364, %vm459
    %vm516 = vmor %vm365, %vm460
    %vm517 = vmor %vm366, %vm461
    %vm518 = vmor %vm367, %vm462
    %vm519 = vmor %vm368, %vm463
    %vm520 = vmor %vm369, %vm464
    %vm521 = vmor %vm370, %vm465
    %vm522 = vmor %vm371, %vm466
    %vm523 = vmor %vm372, %vm467
    %vm524 = vmor %vm373, %vm468
    %vm525 = vmor %vm374, %vm469
    %vm526 = vmor %vm375, %vm470
    %vm527 = vmor %vm376, %vm471
    %vm528 = vmor %vm377, %vm472
    %vm529 = vmor %vm378, %vm473
    %vm530 = vmor %vm379, %vm474
    %vm531 = vmor %vm380, %vm475
    %vm532 = vmor %vm381, %vm476
    %vm533 = vmor %vm382, %vm477
    %vm534 = vmor %vm383, %vm478
    %vm535 = vmor %vm384, %vm479
    %vm536 = vmor %vm385, %vm480
    %vm537 = vmor %vm386, %vm481
    %vm538 = vmor %vm387, %vm482
    %vm539 = vmor %vm388, %vm483
    %v540 = vlaneseq
    %v541 = vshrl.u32 %v540, 7
    %v542 = vsub.s32 0, %v541
    %v543 = vrot.slane %v24, %v542
    %545 = vbcast.lane.b32.xlu0 %v543, 256
    %v546 = vpop.permute.xlu0 %545
    %s548 = sor.u32 256, 8
    %549 = vbcast.lane.b32.xlu0 %v543, %s548
    %v550 = vpop.permute.xlu0 %549
    %v551 = vadd.s32 %v67, 153
    %v552 = vadd.s32 %v71, 153
    %v553 = vadd.s32 %v78, 153
    %v554 = vadd.s32 %v82, 153
    %v555 = vadd.s32 %v89, 153
    %v556 = vadd.s32 %v93, 153
    %v557 = vadd.s32 %v100, 153
    %v558 = vadd.s32 %v104, 153
    %v559 = vadd.s32 %v111, 153
    %v560 = vadd.s32 %v115, 153
    %v561 = vadd.s32 %v122, 153
    %v562 = vadd.s32 %v126, 153
    %v563 = vadd.s32 %v133, 153
    %v564 = vadd.s32 %v137, 153
    %v565 = vadd.s32 %v144, 153
    %v566 = vadd.s32 %v148, 153
    %v567 = vadd.s32 %v155, 153
    %v568 = vadd.s32 %v159, 153
    %v569 = vadd.s32 %v166, 153
    %v570 = vadd.s32 %v170, 153
    %v571 = vadd.s32 %v177, 153
    %v572 = vadd.s32 %v181, 153
    %v573 = vadd.s32 %v244, 153
    %v574 = vadd.s32 %v248, 153
    %v575 = vadd.s32 %v395, 153
    %v576 = vadd.s32 %v399, 153
    %v577 = vadd.s32 %v546, 153
    %v578 = vadd.s32 %v550, 153
    %vm579 = vcmp.eq.s32.totalorder %v551, %v26
    %vm580 = vcmp.eq.s32.totalorder %v551, %v27
    %vm581 = vcmp.eq.s32.totalorder %v552, %v26
    %vm582 = vcmp.eq.s32.totalorder %v552, %v27
    %vm583 = vcmp.eq.s32.totalorder %v553, %v26
    %vm584 = vcmp.eq.s32.totalorder %v553, %v27
    %vm585 = vcmp.eq.s32.totalorder %v554, %v26
    %vm586 = vcmp.eq.s32.totalorder %v554, %v27
    %vm587 = vcmp.eq.s32.totalorder %v555, %v26
    %vm588 = vcmp.eq.s32.totalorder %v555, %v27
    %vm589 = vcmp.eq.s32.totalorder %v556, %v26
    %vm590 = vcmp.eq.s32.totalorder %v556, %v27
    %vm591 = vcmp.eq.s32.totalorder %v557, %v26
    %vm592 = vcmp.eq.s32.totalorder %v557, %v27
    %vm593 = vcmp.eq.s32.totalorder %v558, %v26
    %vm594 = vcmp.eq.s32.totalorder %v558, %v27
    %vm595 = vcmp.eq.s32.totalorder %v559, %v26
    %vm596 = vcmp.eq.s32.totalorder %v559, %v27
    %vm597 = vcmp.eq.s32.totalorder %v560, %v26
    %vm598 = vcmp.eq.s32.totalorder %v560, %v27
    %vm599 = vcmp.eq.s32.totalorder %v561, %v26
    %vm600 = vcmp.eq.s32.totalorder %v561, %v27
    %vm601 = vcmp.eq.s32.totalorder %v562, %v26
    %vm602 = vcmp.eq.s32.totalorder %v562, %v27
    %vm603 = vcmp.eq.s32.totalorder %v563, %v26
    %vm604 = vcmp.eq.s32.totalorder %v563, %v27
    %vm605 = vcmp.eq.s32.totalorder %v564, %v26
    %vm606 = vcmp.eq.s32.totalorder %v564, %v27
    %vm607 = vcmp.eq.s32.totalorder %v565, %v26
    %vm608 = vcmp.eq.s32.totalorder %v565, %v27
    %vm609 = vcmp.eq.s32.totalorder %v566, %v26
    %vm610 = vcmp.eq.s32.totalorder %v566, %v27
    %vm611 = vcmp.eq.s32.totalorder %v567, %v26
    %vm612 = vcmp.eq.s32.totalorder %v567, %v27
    %vm613 = vcmp.eq.s32.totalorder %v568, %v26
    %vm614 = vcmp.eq.s32.totalorder %v568, %v27
    %vm615 = vcmp.eq.s32.totalorder %v569, %v26
    %vm616 = vcmp.eq.s32.totalorder %v569, %v27
    %vm617 = vcmp.eq.s32.totalorder %v570, %v26
    %vm618 = vcmp.eq.s32.totalorder %v570, %v27
    %vm619 = vcmp.eq.s32.totalorder %v571, %v26
    %vm620 = vcmp.eq.s32.totalorder %v571, %v27
    %vm621 = vcmp.eq.s32.totalorder %v572, %v26
    %vm622 = vcmp.eq.s32.totalorder %v572, %v27
    %vm623 = vcmp.eq.s32.totalorder %v573, %v26
    %vm624 = vcmp.eq.s32.totalorder %v573, %v27
    %vm625 = vcmp.eq.s32.totalorder %v574, %v26
    %vm626 = vcmp.eq.s32.totalorder %v574, %v27
    %vm627 = vcmp.eq.s32.totalorder %v575, %v26
    %vm628 = vcmp.eq.s32.totalorder %v575, %v27
    %vm629 = vcmp.eq.s32.totalorder %v576, %v26
    %vm630 = vcmp.eq.s32.totalorder %v576, %v27
    %vm631 = vcmp.eq.s32.totalorder %v577, %v26
    %vm632 = vcmp.eq.s32.totalorder %v577, %v27
    %vm633 = vcmp.eq.s32.totalorder %v578, %v26
    %vm634 = vcmp.eq.s32.totalorder %v578, %v27
    %vm635 = vmor %vm484, %vm579
    %vm636 = vmor %vm485, %vm580
    %vm637 = vmor %vm486, %vm581
    %vm638 = vmor %vm487, %vm582
    %vm639 = vmor %vm488, %vm583
    %vm640 = vmor %vm489, %vm584
    %vm641 = vmor %vm490, %vm585
    %vm642 = vmor %vm491, %vm586
    %vm643 = vmor %vm492, %vm587
    %vm644 = vmor %vm493, %vm588
    %vm645 = vmor %vm494, %vm589
    %vm646 = vmor %vm495, %vm590
    %vm647 = vmor %vm496, %vm591
    %vm648 = vmor %vm497, %vm592
    %vm649 = vmor %vm498, %vm593
    %vm650 = vmor %vm499, %vm594
    %vm651 = vmor %vm500, %vm595
    %vm652 = vmor %vm501, %vm596
    %vm653 = vmor %vm502, %vm597
    %vm654 = vmor %vm503, %vm598
    %vm655 = vmor %vm504, %vm599
    %vm656 = vmor %vm505, %vm600
    %vm657 = vmor %vm506, %vm601
    %vm658 = vmor %vm507, %vm602
    %vm659 = vmor %vm508, %vm603
    %vm660 = vmor %vm509, %vm604
    %vm661 = vmor %vm510, %vm605
    %vm662 = vmor %vm511, %vm606
    %vm663 = vmor %vm512, %vm607
    %vm664 = vmor %vm513, %vm608
    %vm665 = vmor %vm514, %vm609
    %vm666 = vmor %vm515, %vm610
    %vm667 = vmor %vm516, %vm611
    %vm668 = vmor %vm517, %vm612
    %vm669 = vmor %vm518, %vm613
    %vm670 = vmor %vm519, %vm614
    %vm671 = vmor %vm520, %vm615
    %vm672 = vmor %vm521, %vm616
    %vm673 = vmor %vm522, %vm617
    %vm674 = vmor %vm523, %vm618
    %vm675 = vmor %vm524, %vm619
    %vm676 = vmor %vm525, %vm620
    %vm677 = vmor %vm526, %vm621
    %vm678 = vmor %vm527, %vm622
    %vm679 = vmor %vm528, %vm623
    %vm680 = vmor %vm529, %vm624
    %vm681 = vmor %vm530, %vm625
    %vm682 = vmor %vm531, %vm626
    %vm683 = vmor %vm532, %vm627
    %vm684 = vmor %vm533, %vm628
    %vm685 = vmor %vm534, %vm629
    %vm686 = vmor %vm535, %vm630
    %vm687 = vmor %vm536, %vm631
    %vm688 = vmor %vm537, %vm632
    %vm689 = vmor %vm538, %vm633
    %vm690 = vmor %vm539, %vm634
    %v691 = vlaneseq
    %v692 = vshrl.u32 %v691, 7
    %v693 = vsub.s32 1, %v692
    %v694 = vrot.slane %v24, %v693
    %696 = vbcast.lane.b32.xlu0 %v694, 256
    %v697 = vpop.permute.xlu0 %696
    %s699 = sor.u32 256, 8
    %700 = vbcast.lane.b32.xlu0 %v694, %s699
    %v701 = vpop.permute.xlu0 %700
    %v702 = vadd.s32 %v78, 204
    %v703 = vadd.s32 %v82, 204
    %v704 = vadd.s32 %v89, 204
    %v705 = vadd.s32 %v93, 204
    %v706 = vadd.s32 %v100, 204
    %v707 = vadd.s32 %v104, 204
    %v708 = vadd.s32 %v111, 204
    %v709 = vadd.s32 %v115, 204
    %v710 = vadd.s32 %v122, 204
    %v711 = vadd.s32 %v126, 204
    %v712 = vadd.s32 %v133, 204
    %v713 = vadd.s32 %v137, 204
    %v714 = vadd.s32 %v144, 204
    %v715 = vadd.s32 %v148, 204
    %v716 = vadd.s32 %v155, 204
    %v717 = vadd.s32 %v159, 204
    %v718 = vadd.s32 %v166, 204
    %v719 = vadd.s32 %v170, 204
    %v720 = vadd.s32 %v177, 204
    %v721 = vadd.s32 %v181, 204
    %v722 = vadd.s32 %v244, 204
    %v723 = vadd.s32 %v248, 204
    %v724 = vadd.s32 %v395, 204
    %v725 = vadd.s32 %v399, 204
    %v726 = vadd.s32 %v546, 204
    %v727 = vadd.s32 %v550, 204
    %v728 = vadd.s32 %v697, 204
    %v729 = vadd.s32 %v701, 204
    %vm730 = vcmp.eq.s32.totalorder %v702, %v26
    %vm731 = vcmp.eq.s32.totalorder %v702, %v27
    %vm732 = vcmp.eq.s32.totalorder %v703, %v26
    %vm733 = vcmp.eq.s32.totalorder %v703, %v27
    %vm734 = vcmp.eq.s32.totalorder %v704, %v26
    %vm735 = vcmp.eq.s32.totalorder %v704, %v27
    %vm736 = vcmp.eq.s32.totalorder %v705, %v26
    %vm737 = vcmp.eq.s32.totalorder %v705, %v27
    %vm738 = vcmp.eq.s32.totalorder %v706, %v26
    %vm739 = vcmp.eq.s32.totalorder %v706, %v27
    %vm740 = vcmp.eq.s32.totalorder %v707, %v26
    %vm741 = vcmp.eq.s32.totalorder %v707, %v27
    %vm742 = vcmp.eq.s32.totalorder %v708, %v26
    %vm743 = vcmp.eq.s32.totalorder %v708, %v27
    %vm744 = vcmp.eq.s32.totalorder %v709, %v26
    %vm745 = vcmp.eq.s32.totalorder %v709, %v27
    %vm746 = vcmp.eq.s32.totalorder %v710, %v26
    %vm747 = vcmp.eq.s32.totalorder %v710, %v27
    %vm748 = vcmp.eq.s32.totalorder %v711, %v26
    %vm749 = vcmp.eq.s32.totalorder %v711, %v27
    %vm750 = vcmp.eq.s32.totalorder %v712, %v26
    %vm751 = vcmp.eq.s32.totalorder %v712, %v27
    %vm752 = vcmp.eq.s32.totalorder %v713, %v26
    %vm753 = vcmp.eq.s32.totalorder %v713, %v27
    %vm754 = vcmp.eq.s32.totalorder %v714, %v26
    %vm755 = vcmp.eq.s32.totalorder %v714, %v27
    %vm756 = vcmp.eq.s32.totalorder %v715, %v26
    %vm757 = vcmp.eq.s32.totalorder %v715, %v27
    %vm758 = vcmp.eq.s32.totalorder %v716, %v26
    %vm759 = vcmp.eq.s32.totalorder %v716, %v27
    %vm760 = vcmp.eq.s32.totalorder %v717, %v26
    %vm761 = vcmp.eq.s32.totalorder %v717, %v27
    %vm762 = vcmp.eq.s32.totalorder %v718, %v26
    %vm763 = vcmp.eq.s32.totalorder %v718, %v27
    %vm764 = vcmp.eq.s32.totalorder %v719, %v26
    %vm765 = vcmp.eq.s32.totalorder %v719, %v27
    %vm766 = vcmp.eq.s32.totalorder %v720, %v26
    %vm767 = vcmp.eq.s32.totalorder %v720, %v27
    %vm768 = vcmp.eq.s32.totalorder %v721, %v26
    %vm769 = vcmp.eq.s32.totalorder %v721, %v27
    %vm770 = vcmp.eq.s32.totalorder %v722, %v26
    %vm771 = vcmp.eq.s32.totalorder %v722, %v27
    %vm772 = vcmp.eq.s32.totalorder %v723, %v26
    %vm773 = vcmp.eq.s32.totalorder %v723, %v27
    %vm774 = vcmp.eq.s32.totalorder %v724, %v26
    %vm775 = vcmp.eq.s32.totalorder %v724, %v27
    %vm776 = vcmp.eq.s32.totalorder %v725, %v26
    %vm777 = vcmp.eq.s32.totalorder %v725, %v27
    %vm778 = vcmp.eq.s32.totalorder %v726, %v26
    %vm779 = vcmp.eq.s32.totalorder %v726, %v27
    %vm780 = vcmp.eq.s32.totalorder %v727, %v26
    %vm781 = vcmp.eq.s32.totalorder %v727, %v27
    %vm782 = vcmp.eq.s32.totalorder %v728, %v26
    %vm783 = vcmp.eq.s32.totalorder %v728, %v27
    %vm784 = vcmp.eq.s32.totalorder %v729, %v26
    %vm785 = vcmp.eq.s32.totalorder %v729, %v27
    %vm786 = vmor %vm635, %vm730
    %vm787 = vmor %vm636, %vm731
    %vm788 = vmor %vm637, %vm732
    %vm789 = vmor %vm638, %vm733
    %vm790 = vmor %vm639, %vm734
    %vm791 = vmor %vm640, %vm735
    %vm792 = vmor %vm641, %vm736
    %vm793 = vmor %vm642, %vm737
    %vm794 = vmor %vm643, %vm738
    %vm795 = vmor %vm644, %vm739
    %vm796 = vmor %vm645, %vm740
    %vm797 = vmor %vm646, %vm741
    %vm798 = vmor %vm647, %vm742
    %vm799 = vmor %vm648, %vm743
    %vm800 = vmor %vm649, %vm744
    %vm801 = vmor %vm650, %vm745
    %vm802 = vmor %vm651, %vm746
    %vm803 = vmor %vm652, %vm747
    %vm804 = vmor %vm653, %vm748
    %vm805 = vmor %vm654, %vm749
    %vm806 = vmor %vm655, %vm750
    %vm807 = vmor %vm656, %vm751
    %vm808 = vmor %vm657, %vm752
    %vm809 = vmor %vm658, %vm753
    %vm810 = vmor %vm659, %vm754
    %vm811 = vmor %vm660, %vm755
    %vm812 = vmor %vm661, %vm756
    %vm813 = vmor %vm662, %vm757
    %vm814 = vmor %vm663, %vm758
    %vm815 = vmor %vm664, %vm759
    %vm816 = vmor %vm665, %vm760
    %vm817 = vmor %vm666, %vm761
    %vm818 = vmor %vm667, %vm762
    %vm819 = vmor %vm668, %vm763
    %vm820 = vmor %vm669, %vm764
    %vm821 = vmor %vm670, %vm765
    %vm822 = vmor %vm671, %vm766
    %vm823 = vmor %vm672, %vm767
    %vm824 = vmor %vm673, %vm768
    %vm825 = vmor %vm674, %vm769
    %vm826 = vmor %vm675, %vm770
    %vm827 = vmor %vm676, %vm771
    %vm828 = vmor %vm677, %vm772
    %vm829 = vmor %vm678, %vm773
    %vm830 = vmor %vm679, %vm774
    %vm831 = vmor %vm680, %vm775
    %vm832 = vmor %vm681, %vm776
    %vm833 = vmor %vm682, %vm777
    %vm834 = vmor %vm683, %vm778
    %vm835 = vmor %vm684, %vm779
    %vm836 = vmor %vm685, %vm780
    %vm837 = vmor %vm686, %vm781
    %vm838 = vmor %vm687, %vm782
    %vm839 = vmor %vm688, %vm783
    %vm840 = vmor %vm689, %vm784
    %vm841 = vmor %vm690, %vm785
    %v842 = vsel %vm786, 1, 0
    %v843 = vsel %vm787, 1, 0
    %v844 = vsel %vm788, 1, 0
    %v845 = vsel %vm789, 1, 0
    %v846 = vsel %vm790, 1, 0
    %v847 = vsel %vm791, 1, 0
    %v848 = vsel %vm792, 1, 0
    %v849 = vsel %vm793, 1, 0
    %v850 = vsel %vm794, 1, 0
    %v851 = vsel %vm795, 1, 0
    %v852 = vsel %vm796, 1, 0
    %v853 = vsel %vm797, 1, 0
    %v854 = vsel %vm798, 1, 0
    %v855 = vsel %vm799, 1, 0
    %v856 = vsel %vm800, 1, 0
    %v857 = vsel %vm801, 1, 0
    %v858 = vsel %vm802, 1, 0
    %v859 = vsel %vm803, 1, 0
    %v860 = vsel %vm804, 1, 0
    %v861 = vsel %vm805, 1, 0
    %v862 = vsel %vm806, 1, 0
    %v863 = vsel %vm807, 1, 0
    %v864 = vsel %vm808, 1, 0
    %v865 = vsel %vm809, 1, 0
    %v866 = vsel %vm810, 1, 0
    %v867 = vsel %vm811, 1, 0
    %v868 = vsel %vm812, 1, 0
    %v869 = vsel %vm813, 1, 0
    %v870 = vsel %vm814, 1, 0
    %v871 = vsel %vm815, 1, 0
    %v872 = vsel %vm816, 1, 0
    %v873 = vsel %vm817, 1, 0
    %v874 = vsel %vm818, 1, 0
    %v875 = vsel %vm819, 1, 0
    %v876 = vsel %vm820, 1, 0
    %v877 = vsel %vm821, 1, 0
    %v878 = vsel %vm822, 1, 0
    %v879 = vsel %vm823, 1, 0
    %v880 = vsel %vm824, 1, 0
    %v881 = vsel %vm825, 1, 0
    %v882 = vsel %vm826, 1, 0
    %v883 = vsel %vm827, 1, 0
    %v884 = vsel %vm828, 1, 0
    %v885 = vsel %vm829, 1, 0
    %v886 = vsel %vm830, 1, 0
    %v887 = vsel %vm831, 1, 0
    %v888 = vsel %vm832, 1, 0
    %v889 = vsel %vm833, 1, 0
    %v890 = vsel %vm834, 1, 0
    %v891 = vsel %vm835, 1, 0
    %v892 = vsel %vm836, 1, 0
    %v893 = vsel %vm837, 1, 0
    %v894 = vsel %vm838, 1, 0
    %v895 = vsel %vm839, 1, 0
    %v896 = vsel %vm840, 1, 0
    %v897 = vsel %vm841, 1, 0
    %v898 = vcvt.s32.f32 %v842
    %v899 = vcvt.s32.f32 %v843
    %v900 = vcvt.s32.f32 %v844
    %v901 = vcvt.s32.f32 %v845
    %v902 = vcvt.s32.f32 %v846
    %v903 = vcvt.s32.f32 %v847
    %v904 = vcvt.s32.f32 %v848
    %v905 = vcvt.s32.f32 %v849
    %v906 = vcvt.s32.f32 %v850
    %v907 = vcvt.s32.f32 %v851
    %v908 = vcvt.s32.f32 %v852
    %v909 = vcvt.s32.f32 %v853
    %v910 = vcvt.s32.f32 %v854
    %v911 = vcvt.s32.f32 %v855
    %v912 = vcvt.s32.f32 %v856
    %v913 = vcvt.s32.f32 %v857
    %v914 = vcvt.s32.f32 %v858
    %v915 = vcvt.s32.f32 %v859
    %v916 = vcvt.s32.f32 %v860
    %v917 = vcvt.s32.f32 %v861
    %v918 = vcvt.s32.f32 %v862
    %v919 = vcvt.s32.f32 %v863
    %v920 = vcvt.s32.f32 %v864
    %v921 = vcvt.s32.f32 %v865
    %v922 = vcvt.s32.f32 %v866
    %v923 = vcvt.s32.f32 %v867
    %v924 = vcvt.s32.f32 %v868
    %v925 = vcvt.s32.f32 %v869
    %v926 = vcvt.s32.f32 %v870
    %v927 = vcvt.s32.f32 %v871
    %v928 = vcvt.s32.f32 %v872
    %v929 = vcvt.s32.f32 %v873
    %v930 = vcvt.s32.f32 %v874
    %v931 = vcvt.s32.f32 %v875
    %v932 = vcvt.s32.f32 %v876
    %v933 = vcvt.s32.f32 %v877
    %v934 = vcvt.s32.f32 %v878
    %v935 = vcvt.s32.f32 %v879
    %v936 = vcvt.s32.f32 %v880
    %v937 = vcvt.s32.f32 %v881
    %v938 = vcvt.s32.f32 %v882
    %v939 = vcvt.s32.f32 %v883
    %v940 = vcvt.s32.f32 %v884
    %v941 = vcvt.s32.f32 %v885
    %v942 = vcvt.s32.f32 %v886
    %v943 = vcvt.s32.f32 %v887
    %v944 = vcvt.s32.f32 %v888
    %v945 = vcvt.s32.f32 %v889
    %v946 = vcvt.s32.f32 %v890
    %v947 = vcvt.s32.f32 %v891
    %v948 = vcvt.s32.f32 %v892
    %v949 = vcvt.s32.f32 %v893
    %v950 = vcvt.s32.f32 %v894
    %v951 = vcvt.s32.f32 %v895
    %v952 = vcvt.s32.f32 %v896
    %v953 = vcvt.s32.f32 %v897
    %v954 = vpack.c.bf16 %v900, %v898
    %v955 = vpack.c.bf16 %v901, %v899
    %v956 = vpack.c.bf16 %v904, %v902
    %v957 = vpack.c.bf16 %v905, %v903
    %v958 = vpack.c.bf16 %v908, %v906
    %v959 = vpack.c.bf16 %v909, %v907
    %v960 = vpack.c.bf16 %v912, %v910
    %v961 = vpack.c.bf16 %v913, %v911
    %v962 = vpack.c.bf16 %v916, %v914
    %v963 = vpack.c.bf16 %v917, %v915
    %v964 = vpack.c.bf16 %v920, %v918
    %v965 = vpack.c.bf16 %v921, %v919
    %v966 = vpack.c.bf16 %v924, %v922
    %v967 = vpack.c.bf16 %v925, %v923
    %v968 = vpack.c.bf16 %v928, %v926
    %v969 = vpack.c.bf16 %v929, %v927
    %v970 = vpack.c.bf16 %v932, %v930
    %v971 = vpack.c.bf16 %v933, %v931
    %v972 = vpack.c.bf16 %v936, %v934
    %v973 = vpack.c.bf16 %v937, %v935
    %v974 = vpack.c.bf16 %v940, %v938
    %v975 = vpack.c.bf16 %v941, %v939
    %v976 = vpack.c.bf16 %v944, %v942
    %v977 = vpack.c.bf16 %v945, %v943
    %v978 = vpack.c.bf16 %v948, %v946
    %v979 = vpack.c.bf16 %v949, %v947
    %v980 = vpack.c.bf16 %v952, %v950
    %v981 = vpack.c.bf16 %v953, %v951
    %v982 = vld [vmem:[%s1] sm:$0xf]
    %v983 = vld [vmem:[%s1 + $0x4] sm:$0xf]
    %v984 = vld [vmem:[%s1 + $0x8] sm:$0xf]
    %v985 = vld [vmem:[%s1 + $0xc] sm:$0xf]
    %v986 = vld [vmem:[%s1 + $0x10] sm:$0xf]
    %v987 = vld [vmem:[%s1 + $0x14] sm:$0xf]
    %v988 = vld [vmem:[%s1 + $0x18] sm:$0xf]
    %v989 = vld [vmem:[%s1 + $0x1c] sm:$0xf]
    %v990 = vld [vmem:[%s1 + $0x20] sm:$0xf]
    %v991 = vld [vmem:[%s1 + $0x24] sm:$0xf]
    %v992 = vld [vmem:[%s1 + $0x28] sm:$0xf]
    %v993 = vld [vmem:[%s1 + $0x2c] sm:$0xf]
    %v994 = vld [vmem:[%s1 + $0x30] sm:$0xf]
    %v995 = vld [vmem:[%s1 + $0x34] sm:$0xf]
    %v996 = vld [vmem:[%s1 + $0x38] sm:$0xf]
    %v997 = vld [vmem:[%s1 + $0x3c] sm:$0xf]
    %v998 = vld [vmem:[%s1 + $0x40] sm:$0xf]
    %v999 = vld [vmem:[%s1 + $0x44] sm:$0xf]
    %v1000 = vld [vmem:[%s1 + $0x48] sm:$0xf]
    %v1001 = vld [vmem:[%s1 + $0x4c] sm:$0xf]
    %v1002 = vld [vmem:[%s1 + $0x50] sm:$0xf]
    %v1003 = vld [vmem:[%s1 + $0x54] sm:$0xf]
    %v1004 = vld [vmem:[%s1 + $0x58] sm:$0xf]
    %v1005 = vld [vmem:[%s1 + $0x5c] sm:$0xf]
    %v1006 = vld [vmem:[%s1 + $0x60] sm:$0xf]
    %v1007 = vld [vmem:[%s1 + $0x64] sm:$0xf]
    %v1008 = vld [vmem:[%s1 + $0x68] sm:$0xf]
    %v1009 = vld [vmem:[%s1 + $0x6c] sm:$0xf]
    %v1010 = vld [vmem:[%s1 + $0x70] sm:$0xf]
    %v1011 = vld [vmem:[%s1 + $0x74] sm:$0xf]
    %v1012 = vld [vmem:[%s1 + $0x78] sm:$0xf]
    %v1013 = vld [vmem:[%s1 + $0x7c] sm:$0xf]
    %v1046 = vunpack.c.l.b16 %v982
    %v1047 = vunpack.c.l.b16 %v983
    %v1048 = vunpack.c.l.b16 %v984
    %v1049 = vunpack.c.l.b16 %v985
    %v1050 = vunpack.c.l.b16 %v986
    %v1051 = vunpack.c.l.b16 %v987
    %v1052 = vunpack.c.l.b16 %v988
    %v1053 = vunpack.c.l.b16 %v989
    %v1054 = vunpack.c.l.b16 %v990
    %v1055 = vunpack.c.l.b16 %v991
    %v1056 = vunpack.c.l.b16 %v992
    %v1057 = vunpack.c.l.b16 %v993
    %v1058 = vunpack.c.l.b16 %v994
    %v1059 = vunpack.c.l.b16 %v995
    %v1060 = vunpack.c.l.b16 %v996
    %v1061 = vunpack.c.l.b16 %v997
    %v1062 = vunpack.c.l.b16 %v998
    %v1063 = vunpack.c.l.b16 %v999
    %v1064 = vunpack.c.l.b16 %v1000
    %v1065 = vunpack.c.l.b16 %v1001
    %v1066 = vunpack.c.l.b16 %v1002
    %v1067 = vunpack.c.l.b16 %v1003
    %v1068 = vunpack.c.l.b16 %v1004
    %v1069 = vunpack.c.l.b16 %v1005
    %v1070 = vunpack.c.l.b16 %v1006
    %v1071 = vunpack.c.l.b16 %v1007
    %v1072 = vunpack.c.l.b16 %v1008
    %v1073 = vunpack.c.l.b16 %v1009
    %v1074 = vunpack.c.l.b16 %v1010
    %v1075 = vunpack.c.l.b16 %v1011
    %v1076 = vunpack.c.l.b16 %v1012
    %v1077 = vunpack.c.l.b16 %v1013
    %v1078 = vpack.c.b16 %v1047, %v1046
    %v1079 = vpack.c.b16 %v1049, %v1048
    %v1080 = vpack.c.b16 %v1051, %v1050
    %v1081 = vpack.c.b16 %v1053, %v1052
    %v1082 = vpack.c.b16 %v1055, %v1054
    %v1083 = vpack.c.b16 %v1057, %v1056
    %v1084 = vpack.c.b16 %v1059, %v1058
    %v1085 = vpack.c.b16 %v1061, %v1060
    %v1086 = vpack.c.b16 %v1063, %v1062
    %v1087 = vpack.c.b16 %v1065, %v1064
    %v1088 = vpack.c.b16 %v1067, %v1066
    %v1089 = vpack.c.b16 %v1069, %v1068
    %v1090 = vpack.c.b16 %v1071, %v1070
    %v1091 = vpack.c.b16 %v1073, %v1072
    %v1092 = vpack.c.b16 %v1075, %v1074
    %v1093 = vpack.c.b16 %v1077, %v1076
    %1110 = vmatprep.subr.bf16.mxu0 0
    %1111 = vmatpush1.bf16.msra.mxu0 %v1078
    %1112 = vmatprep.subr.bf16.mxu0 0
    %1113 = vmatpush1.bf16.msra.mxu0 %v1079
    %1114 = vmatprep.subr.bf16.mxu0 0
    %1115 = vmatpush1.bf16.msra.mxu0 %v1080
    %1116 = vmatprep.subr.bf16.mxu0 0
    %1117 = vmatpush1.bf16.msra.mxu0 %v1081
    %1118 = vmatprep.subr.bf16.mxu0 0
    %1119 = vmatpush1.bf16.msra.mxu0 %v1082
    %1120 = vmatprep.subr.bf16.mxu0 0
    %1121 = vmatpush1.bf16.msra.mxu0 %v1083
    %1122 = vmatprep.subr.bf16.mxu0 0
    %1123 = vmatpush1.bf16.msra.mxu0 %v1084
    %1124 = vmatprep.subr.bf16.mxu0 0
    %1125 = vmatpush1.bf16.msra.mxu0 %v1085
    %1126 = vmatprep.subr.bf16.mxu0 0
    %1127 = vmatpush1.bf16.msra.mxu0 %v1086
    %1128 = vmatprep.subr.bf16.mxu0 0
    %1129 = vmatpush1.bf16.msra.mxu0 %v1087
    %1130 = vmatprep.subr.bf16.mxu0 0
    %1131 = vmatpush1.bf16.msra.mxu0 %v1088
    %1132 = vmatprep.subr.bf16.mxu0 0
    %1133 = vmatpush1.bf16.msra.mxu0 %v1089
    %1134 = vmatprep.subr.bf16.mxu0 0
    %1135 = vmatpush1.bf16.msra.mxu0 %v1090
    %1136 = vmatprep.subr.bf16.mxu0 0
    %1137 = vmatpush1.bf16.msra.mxu0 %v1091
    %1138 = vmatprep.subr.bf16.mxu0 0
    %1139 = vmatpush1.bf16.msra.mxu0 %v1092
    %1140 = vmatprep.subr.bf16.mxu0 0
    %1141 = vmatpush1.bf16.msra.mxu0 %v1093
    %1142 = vmatprep.mubr.bf16.mxu0 %v955
    %1143 = vmatmul.mubr.bf16.gmra.mrb[0].mxu0 %v954
    %v1144 = vpop.f32.mrb[0].mxu0
    %v1145 = vadd.f32 0.0, %v1144
    %v1146 = vpop.f32.mrb[0].mxu0
    %v1147 = vpop.f32.mrb[0].mxu0
    %v1148 = vadd.f32 0.0, %v1147
    %v1149 = vpop.f32.mrb[0].mxu0
    %1150 = vmatprep.mubr.bf16.mxu0 %v957
    %1151 = vmatmul.mubr.bf16.gmra.mrb[0].mxu0 %v956
    %v1152 = vpop.f32.mrb[0].mxu0
    %v1153 = vadd.f32 0.0, %v1152
    %v1154 = vpop.f32.mrb[0].mxu0
    %v1155 = vpop.f32.mrb[0].mxu0
    %v1156 = vadd.f32 0.0, %v1155
    %v1157 = vpop.f32.mrb[0].mxu0
    %1158 = vmatprep.mubr.bf16.mxu0 %v959
    %1159 = vmatmul.mubr.bf16.gmra.mrb[0].mxu0 %v958
    %v1160 = vpop.f32.mrb[0].mxu0
    %v1161 = vadd.f32 0.0, %v1160
    %v1162 = vpop.f32.mrb[0].mxu0
    %v1163 = vpop.f32.mrb[0].mxu0
    %v1164 = vadd.f32 0.0, %v1163
    %v1165 = vpop.f32.mrb[0].mxu0
    %1166 = vmatprep.mubr.bf16.mxu0 %v961
    %1167 = vmatmul.mubr.bf16.gmra.mrb[0].mxu0 %v960
    %v1168 = vpop.f32.mrb[0].mxu0
    %v1169 = vadd.f32 0.0, %v1168
    %v1170 = vpop.f32.mrb[0].mxu0
    %v1171 = vpop.f32.mrb[0].mxu0
    %v1172 = vadd.f32 0.0, %v1171
    %v1173 = vpop.f32.mrb[0].mxu0
    %1174 = vmatprep.mubr.bf16.mxu0 %v963
    %1175 = vmatmul.mubr.bf16.gmra.mrb[0].mxu0 %v962
    %v1176 = vpop.f32.mrb[0].mxu0
    %v1177 = vadd.f32 0.0, %v1176
    %v1178 = vpop.f32.mrb[0].mxu0
    %v1179 = vpop.f32.mrb[0].mxu0
    %v1180 = vadd.f32 0.0, %v1179
    %v1181 = vpop.f32.mrb[0].mxu0
    %1182 = vmatprep.mubr.bf16.mxu0 %v965
    %1183 = vmatmul.mubr.bf16.gmra.mrb[0].mxu0 %v964
    %v1184 = vpop.f32.mrb[0].mxu0
    %v1185 = vadd.f32 0.0, %v1184
    %v1186 = vpop.f32.mrb[0].mxu0
    %v1187 = vpop.f32.mrb[0].mxu0
    %v1188 = vadd.f32 0.0, %v1187
    %v1189 = vpop.f32.mrb[0].mxu0
    %1190 = vmatprep.mubr.bf16.mxu0 %v967
    %1191 = vmatmul.mubr.bf16.gmra.mrb[0].mxu0 %v966
    %v1192 = vpop.f32.mrb[0].mxu0
    %v1193 = vadd.f32 0.0, %v1192
    %v1194 = vpop.f32.mrb[0].mxu0
    %v1195 = vpop.f32.mrb[0].mxu0
    %v1196 = vadd.f32 0.0, %v1195
    %v1197 = vpop.f32.mrb[0].mxu0
    %1198 = vmatprep.mubr.bf16.mxu0 %v969
    %1199 = vmatmul.mubr.bf16.gmra.mrb[0].mxu0 %v968
    %v1200 = vpop.f32.mrb[0].mxu0
    %v1201 = vadd.f32 0.0, %v1200
    %v1202 = vpop.f32.mrb[0].mxu0
    %v1203 = vpop.f32.mrb[0].mxu0
    %v1204 = vadd.f32 0.0, %v1203
    %v1205 = vpop.f32.mrb[0].mxu0
    %1206 = vmatprep.mubr.bf16.mxu0 %v971
    %1207 = vmatmul.mubr.bf16.gmra.mrb[0].mxu0 %v970
    %v1208 = vpop.f32.mrb[0].mxu0
    %v1209 = vadd.f32 0.0, %v1208
    %v1210 = vpop.f32.mrb[0].mxu0
    %v1211 = vpop.f32.mrb[0].mxu0
    %v1212 = vadd.f32 0.0, %v1211
    %v1213 = vpop.f32.mrb[0].mxu0
    %1214 = vmatprep.mubr.bf16.mxu0 %v973
    %1215 = vmatmul.mubr.bf16.gmra.mrb[0].mxu0 %v972
    %v1216 = vpop.f32.mrb[0].mxu0
    %v1217 = vadd.f32 0.0, %v1216
    %v1218 = vpop.f32.mrb[0].mxu0
    %v1219 = vpop.f32.mrb[0].mxu0
    %v1220 = vadd.f32 0.0, %v1219
    %v1221 = vpop.f32.mrb[0].mxu0
    %1222 = vmatprep.mubr.bf16.mxu0 %v975
    %1223 = vmatmul.mubr.bf16.gmra.mrb[0].mxu0 %v974
    %v1224 = vpop.f32.mrb[0].mxu0
    %v1225 = vadd.f32 0.0, %v1224
    %v1226 = vpop.f32.mrb[0].mxu0
    %v1227 = vpop.f32.mrb[0].mxu0
    %v1228 = vadd.f32 0.0, %v1227
    %v1229 = vpop.f32.mrb[0].mxu0
    %1230 = vmatprep.mubr.bf16.mxu0 %v977
    %1231 = vmatmul.mubr.bf16.gmra.mrb[0].mxu0 %v976
    %v1232 = vpop.f32.mrb[0].mxu0
    %v1233 = vadd.f32 0.0, %v1232
    %v1234 = vpop.f32.mrb[0].mxu0
    %v1235 = vpop.f32.mrb[0].mxu0
    %v1236 = vadd.f32 0.0, %v1235
    %v1237 = vpop.f32.mrb[0].mxu0
    %1238 = vmatprep.mubr.bf16.mxu0 %v979
    %1239 = vmatmul.mubr.bf16.gmra.mrb[0].mxu0 %v978
    %v1240 = vpop.f32.mrb[0].mxu0
    %v1241 = vadd.f32 0.0, %v1240
    %v1242 = vpop.f32.mrb[0].mxu0
    %v1243 = vpop.f32.mrb[0].mxu0
    %v1244 = vadd.f32 0.0, %v1243
    %v1245 = vpop.f32.mrb[0].mxu0
    %1246 = vmatprep.mubr.bf16.mxu0 %v981
    %1247 = vmatmul.mubr.bf16.gmra.mrb[0].mxu0 %v980
    %v1248 = vpop.f32.mrb[0].mxu0
    %v1249 = vadd.f32 0.0, %v1248
    %v1250 = vpop.f32.mrb[0].mxu0
    %v1251 = vpop.f32.mrb[0].mxu0
    %v1252 = vadd.f32 0.0, %v1251
    %v1253 = vpop.f32.mrb[0].mxu0
    %1254 = vdwg.mxu0
    %vm1255 = vcmask 523264
    %v1256 = vsel %vm1255, %v1145, -inf
    %v1257 = vsel %vm1255, %v1153, -inf
    %v1258 = vsel %vm1255, %v1161, -inf
    %v1259 = vmax.f32 %v1256, %v1258
    %v1260 = vsel %vm1255, %v1169, -inf
    %v1261 = vmax.f32 %v1257, %v1260
    %v1262 = vsel %vm1255, %v1177, -inf
    %v1263 = vmax.f32 %v1259, %v1262
    %v1264 = vsel %vm1255, %v1185, -inf
    %v1265 = vmax.f32 %v1261, %v1264
    %v1266 = vsel %vm1255, %v1193, -inf
    %v1267 = vmax.f32 %v1263, %v1266
    %v1268 = vsel %vm1255, %v1201, -inf
    %v1269 = vmax.f32 %v1265, %v1268
    %v1270 = vsel %vm1255, %v1209, -inf
    %v1271 = vmax.f32 %v1267, %v1270
    %v1272 = vsel %vm1255, %v1217, -inf
    %v1273 = vmax.f32 %v1269, %v1272
    %v1274 = vsel %vm1255, %v1225, -inf
    %v1275 = vmax.f32 %v1271, %v1274
    %v1276 = vsel %vm1255, %v1233, -inf
    %v1277 = vmax.f32 %v1273, %v1276
    %v1278 = vsel %vm1255, %v1241, -inf
    %v1279 = vmax.f32 %v1275, %v1278
    %v1280 = vsel %vm1255, %v1249, -inf
    %v1281 = vmax.f32 %v1277, %v1280
    %v1282 = vmax.f32 %v1279, %v1281
    %v1283 = vsel %vm1255, %v1148, -inf
    %v1284 = vsel %vm1255, %v1156, -inf
    %v1285 = vsel %vm1255, %v1164, -inf
    %v1286 = vmax.f32 %v1283, %v1285
    %v1287 = vsel %vm1255, %v1172, -inf
    %v1288 = vmax.f32 %v1284, %v1287
    %v1289 = vsel %vm1255, %v1180, -inf
    %v1290 = vmax.f32 %v1286, %v1289
    %v1291 = vsel %vm1255, %v1188, -inf
    %v1292 = vmax.f32 %v1288, %v1291
    %v1293 = vsel %vm1255, %v1196, -inf
    %v1294 = vmax.f32 %v1290, %v1293
    %v1295 = vsel %vm1255, %v1204, -inf
    %v1296 = vmax.f32 %v1292, %v1295
    %v1297 = vsel %vm1255, %v1212, -inf
    %v1298 = vmax.f32 %v1294, %v1297
    %v1299 = vsel %vm1255, %v1220, -inf
    %v1300 = vmax.f32 %v1296, %v1299
    %v1301 = vsel %vm1255, %v1228, -inf
    %v1302 = vmax.f32 %v1298, %v1301
    %v1303 = vsel %vm1255, %v1236, -inf
    %v1304 = vmax.f32 %v1300, %v1303
    %v1305 = vsel %vm1255, %v1244, -inf
    %v1306 = vmax.f32 %v1302, %v1305
    %v1307 = vsel %vm1255, %v1252, -inf
    %v1308 = vmax.f32 %v1304, %v1307
    %v1309 = vmax.f32 %v1306, %v1308
    %v1310 = vld [vmem:[%s2] sm:$0x1]
    %v1312 = vlaneseq
    %v1313 = vshrl.u32 %v1312, 7
    %v1314 = vsub.s32 0, %v1313
    %v1315 = vrot.slane %v1310, %v1314
    %v1317 = vadd.f32 %v1282, %v1315
    %v1318 = vadd.f32 %v1309, %v1315
    %v1319 = vmax.f32 %v1317, 0.0
    %v1320 = vmax.f32 %v1318, 0.0
    %v1321 = vpack.c.bf16 %v1320, %v1319
    %v1322 = vld [vmem:[%s3] sm:$0xf]
    %v1323 = vld [vmem:[%s3 + $0x4] sm:$0xf]
    %v1324 = vld [vmem:[%s3 + $0x8] sm:$0xf]
    %v1325 = vld [vmem:[%s3 + $0xc] sm:$0xf]
    %v1326 = vld [vmem:[%s3 + $0x10] sm:$0xf]
    %v1327 = vld [vmem:[%s3 + $0x14] sm:$0xf]
    %v1328 = vld [vmem:[%s3 + $0x18] sm:$0xf]
    %v1329 = vld [vmem:[%s3 + $0x1c] sm:$0xf]
    %v1330 = vld [vmem:[%s4] sm:$0x1]
    %v1332 = vlaneseq
    %v1333 = vshrl.u32 %v1332, 7
    %v1334 = vsub.s32 0, %v1333
    %v1335 = vrot.slane %v1330, %v1334
    %v1345 = vunpack.c.l.b16 %v1322
    %v1346 = vunpack.c.l.b16 %v1323
    %v1347 = vunpack.c.l.b16 %v1324
    %v1348 = vunpack.c.l.b16 %v1325
    %v1349 = vunpack.c.l.b16 %v1326
    %v1350 = vunpack.c.l.b16 %v1327
    %v1351 = vunpack.c.l.b16 %v1328
    %v1352 = vunpack.c.l.b16 %v1329
    %v1353 = vpack.c.b16 %v1346, %v1345
    %v1354 = vpack.c.b16 %v1348, %v1347
    %v1355 = vpack.c.b16 %v1350, %v1349
    %v1356 = vpack.c.b16 %v1352, %v1351
    %v1362 = vsel %vm1255, %v1321, 0
    %1364 = vmatprep.subr.bf16.mxu0 0
    %1365 = vmatpush1.bf16.msra.mxu0 %v1353
    %1366 = vmatprep.subr.bf16.mxu0 0
    %1367 = vmatpush1.bf16.msra.mxu0 %v1354
    %1368 = vmatprep.subr.bf16.mxu0 0
    %1369 = vmatpush1.bf16.msra.mxu0 %v1355
    %1370 = vmatprep.subr.bf16.mxu0 0
    %1371 = vmatpush1.bf16.msra.mxu0 %v1356
    %1372 = vmatprep.subr.bf16.mxu0 0
    %1373 = vmatpush1.bf16.msra.mxu0 0
    %1374 = vmatprep.subr.bf16.mxu0 0
    %1375 = vmatpush1.bf16.msra.mxu0 0
    %1376 = vmatprep.subr.bf16.mxu0 0
    %1377 = vmatpush1.bf16.msra.mxu0 0
    %1378 = vmatprep.subr.bf16.mxu0 0
    %1379 = vmatpush1.bf16.msra.mxu0 0
    %1380 = vmatprep.subr.bf16.mxu0 0
    %1381 = vmatpush1.bf16.msra.mxu0 0
    %1382 = vmatprep.subr.bf16.mxu0 0
    %1383 = vmatpush1.bf16.msra.mxu0 0
    %1384 = vmatprep.subr.bf16.mxu0 0
    %1385 = vmatpush1.bf16.msra.mxu0 0
    %1386 = vmatprep.subr.bf16.mxu0 0
    %1387 = vmatpush1.bf16.msra.mxu0 0
    %1388 = vmatprep.subr.bf16.mxu0 0
    %1389 = vmatpush1.bf16.msra.mxu0 0
    %1390 = vmatprep.subr.bf16.mxu0 0
    %1391 = vmatpush1.bf16.msra.mxu0 0
    %1392 = vmatprep.subr.bf16.mxu0 0
    %1393 = vmatpush1.bf16.msra.mxu0 0
    %1394 = vmatprep.subr.bf16.mxu0 0
    %1395 = vmatpush1.bf16.msra.mxu0 0
    %1396 = vmatprep.mubr.bf16.mxu0 0
    %1397 = vmatmul.mubr.bf16.gmra.mrb[0].mxu0 %v1362
    %v1398 = vpop.f32.mrb[0].mxu0
    %v1399 = vadd.f32 %v1335, %v1398
    %v1400 = vpop.f32.mrb[0].mxu0
    %v1401 = vpop.f32.mrb[0].mxu0
    %v1402 = vadd.f32 %v1335, %v1401
    %v1403 = vpop.f32.mrb[0].mxu0
    %1404 = vdwg.mxu0
    %v1405 = vmax.f32 %v1399, 0.0
    %v1406 = vmax.f32 %v1402, 0.0
    %v1407 = vxor.u32 %v1399, 2147483648
    %v1408 = vxor.u32 %v1402, 2147483648
    %v1409 = vmul.f32 %v1407, 1.442695
    %v1410 = vpow.pop %v1409
    %v1411 = vmul.f32 %v1408, 1.442695
    %v1412 = vpow.pop %v1411
    %v1413 = vadd.f32 %v1410, 1.0
    %v1414 = vadd.f32 %v1412, 1.0
    %v1415 = vrcp.pop %v1413
    %v1416 = vmul.f32 1.0, %v1415
    %v1417 = vrcp.pop %v1414
    %v1418 = vmul.f32 1.0, %v1417
    %1421 = vrot.lane.b32.xlu0 %v1405, 64
    %v1422 = vpop.permute.xlu0 %1421
    %1423 = vrot.lane.b32.xlu0 %v1406, 64
    %v1424 = vpop.permute.xlu0 %1423
    %v1427 = vmul.f32 %v1416, %v1422
    %v1428 = vmul.f32 %v1418, %v1424
    %v1429 = vsub.f32 1.0, %v1416
    %v1430 = vsub.f32 1.0, %v1418
    %1433 = vrot.lane.b32.xlu0 %v1319, 64
    %v1434 = vpop.permute.xlu0 %1433
    %1435 = vrot.lane.b32.xlu0 %v1320, 64
    %v1436 = vpop.permute.xlu0 %1435
    %v1439 = vmul.f32 %v1429, %v1434
    %v1440 = vmul.f32 %v1430, %v1436
    %v1441 = vadd.f32 %v1427, %v1439
    %v1442 = vadd.f32 %v1428, %v1440
    %1445 = vrot.lane.b32.xlu0 %v1441, 64
    %v1446 = vpop.permute.xlu0 %1445
    %1447 = vrot.lane.b32.xlu0 %v1442, 64
    %v1448 = vpop.permute.xlu0 %1447
    %1451 = vst.msk [vmem:[#allocation2] sm:$0xff] %vm1255, %v1446
    %1452 = vst.msk [vmem:[#allocation2 + $0x8] sm:$0xff] %vm1255, %v1448
    // Predicated region
    $region22: #{tpu_custom_call.1} parent=1 // pred_check
      _
    $region23: #{tpu_custom_call.1} parent=1 // pred_check_branch
      %1454 = sbr.rel (0) target = $region25
    $region24: #{tpu_custom_call.1} parent=1 // pred_region
      %s1456 = ssub.s32 256, 256
      %1457 = vsyncadd [#allocation3], %s1456
      %s1458 = sshll.u32 [#allocation2], 4
      %s1459 = int_to_ptr.vmem [resolvable:$true] %s1458
      %1464 = dma.vmem_to_hbm [thread:$0]  %s1459, 256, %s5, [#allocation3], 128, 128, 8
    $region25: #{tpu_custom_call.1} parent=1 // pred_fallthru
      _
    // Predicated region
    $region26: #{tpu_custom_call.1} parent=1 // pred_check
      _
    $region27: #{tpu_custom_call.1} parent=1 // pred_check_branch
      %1466 = sbr.rel (0) target = $region29
    $region28: #{tpu_custom_call.1} parent=1 // pred_region
      %1467 = dma.done [#allocation3], 256
    $region29: #{tpu_custom_call.1} parent=1 // pred_fallthru
      _
    %1468 = vsyncpa [#allocation3], 1

</llo_original>
